<compile_context>
chip_gen: v5e
topology: v5e:2x2
jax: 0.10.0
libtpu: 0.0.40
codegen_flags: <defaults>
</compile_context>

<pallas_src>
import numpy as np
import jax
import jax.numpy as jnp
from jax.experimental import pallas as pl
from jax.experimental.pallas import tpu as pltpu

_VMEM = pl.BlockSpec(memory_space=pltpu.MemorySpace.VMEM)
_MXU_DTYPE = jnp.bfloat16          # MXU operand dtype; accumulation is f32

# (Cin, Cout, H, W) per attention block. Input spatial (24, 8): three 2x2 pools
# leave a (3, 1) map with 24 channels -> flatten 24*3 = 72 = linear1 input.
_BLOCK_CFG = ((4, 8, 24, 8), (8, 16, 12, 4), (16, 24, 6, 2))
_NUM_CLASSES = 10


# ----------------------------------------------------------------------------
# Fused Pallas kernel
# ----------------------------------------------------------------------------
def _dot(a, b):
    return jnp.dot(a.astype(_MXU_DTYPE), b.astype(_MXU_DTYPE),
                   preferred_element_type=jnp.float32)


def _attention_block(a, sss, r2, gblk, bc_t, ba_t):
    """conv3x3(pad=1) + 1x1 sigmoid gate + relu + 2x2 maxpool, all as matmuls.

    a    : (B*H, W*Cin)            activation, rows (b,h), cols (w,c)
    sss  : (3*2*Nh, B*H)           0/1 h-tap / pool-row selection (ky, dy, row)
    r2   : (3*W*Cin, 2*Wo*Cout)    folded conv weights (ky blocks of rows)
    gblk : (2*Wo*Cout, 2*Wo*Cout)  block-diagonal 1x1 gate weights
    bc_t, ba_t : (1, 2*Wo*Cout)    tiled conv / gate biases (f32)
    returns (Nh, Wo*Cout) pooled activation in the same (rows, (w,c)) layout.
    """
    rows2 = sss.shape[0] // 3        # 2*Nh (both pool row-parities stacked)
    wcin = a.shape[1]                # W*Cin
    woc = r2.shape[1] // 2           # Wo*Cout

    t = _dot(sss, a)                 # (3*rows2, W*Cin): h-shifted copies
    v = _dot(t[0 * rows2:1 * rows2], r2[0 * wcin:1 * wcin])
    v = v + _dot(t[1 * rows2:2 * rows2], r2[1 * wcin:2 * wcin])
    v = v + _dot(t[2 * rows2:3 * rows2], r2[2 * wcin:3 * wcin])
    v = v + bc_t                     # conv3x3 output at all 4 pool positions

    g = _dot(v, gblk) + ba_t                                   # 1x1 gate conv
    gate = pl.reciprocal(1.0 + jnp.exp(-g), approx=True)       # sigmoid (EUP)
    y = jnp.maximum(v * gate, 0.0)                             # attention * relu

    nh = rows2 // 2                  # 2x2 maxpool = max of the 4 parity slabs
    return jnp.maximum(
        jnp.maximum(y[0:nh, 0:woc], y[0:nh, woc:2 * woc]),
        jnp.maximum(y[nh:2 * nh, 0:woc], y[nh:2 * nh, woc:2 * woc]))


def _fused_forward_kernel(a1,
                          sss1, r21, g1, bc1, ba1,
                          sss2, r22, g2, bc2, ba2,
                          sss3, r23, g3, bc3, ba3,
                          w1, b1, w2, b2, w3, b3,
                          o_ref):
    batch = o_ref.shape[0]

    x = _attention_block(a1[...], sss1[...], r21[...], g1[...], bc1[...], ba1[...])
    x = _attention_block(x, sss2[...], r22[...], g2[...], bc2[...], ba2[...])
    # Block-3 rows come out ordered (h, b) (see prepare_params) for the head.
    x = _attention_block(x, sss3[...], r23[...], g3[...], bc3[...], ba3[...])

    # linear1 over the torch NCHW flatten: w1's rows were pre-permuted so that
    # the h-th row slice of w1 multiplies the batch rows at height h.
    c = x.shape[1]                   # 24 channels
    z = b1[...]
    z = z + _dot(x[0 * batch:1 * batch], w1[0 * c:1 * c])
    z = z + _dot(x[1 * batch:2 * batch], w1[1 * c:2 * c])
    z = z + _dot(x[2 * batch:3 * batch], w1[2 * c:3 * c])
    h1 = jnp.maximum(z, 0.0)
    h2 = jnp.maximum(_dot(h1, w2[...]) + b2[...], 0.0)
    logits = _dot(h2, w3[...]) + b3[...]

    m = jnp.max(logits, axis=-1, keepdims=True)
    e = jnp.exp(logits - m)
    o_ref[...] = e / jnp.sum(e, axis=-1, keepdims=True)


@jax.jit
def attention_model_forward(x_nchw, prep):
    b, c, h, w = x_nchw.shape
    # NCHW -> rows (b,h), cols (w,c); the only out-of-kernel data movement.
    a1 = jnp.transpose(x_nchw, (0, 2, 3, 1)).reshape(b * h, w * c).astype(jnp.float32)
    return pl.pallas_call(
        _fused_forward_kernel,
        out_shape=jax.ShapeDtypeStruct((b, _NUM_CLASSES), jnp.float32),
        in_specs=[_VMEM] * (1 + len(prep)),
        out_specs=_VMEM,
    )(a1, *prep)


# ----------------------------------------------------------------------------
# One-time parameter preparation (folds conv / pool / flatten index plumbing
# into small constant matrices; pure weight preprocessing, no per-call work).
# ----------------------------------------------------------------------------
def _build_sss(batch, h, ho, hb_order):
    n_in, nh = batch * h, batch * ho
    s = np.zeros((3, 2, nh, n_in), np.float32)
    for ky in range(3):
        for dy in range(2):
            for b in range(batch):
                for o in range(ho):
                    hh = 2 * o + dy + ky - 1
                    if 0 <= hh < h:                 # zero padding in h otherwise
                        r = o * batch + b if hb_order else b * ho + o
                        s[ky, dy, r, b * h + hh] = 1.0
    return s.reshape(6 * nh, n_in)


def _build_r2(w, cin, wo, cout, wc):
    wc = np.asarray(wc)                             # (3, 3, Cin, Cout), HWIO
    r2 = np.zeros((3, w * cin, 2 * wo * cout), np.float32)
    for ky in range(3):
        for ww in range(w):
            for dx in range(2):
                for o in range(wo):
                    kx = ww - 2 * o - dx + 1
                    if 0 <= kx < 3:                 # zero padding in w otherwise
                        col = (dx * wo + o) * cout
                        r2[ky, ww * cin:(ww + 1) * cin, col:col + cout] = wc[ky, kx]
    return r2.reshape(3 * w * cin, 2 * wo * cout)


def prepare_params(params, batch):
    # (array, is_mxu_operand) pairs; MXU operands stored in bf16, biases in f32.
    prep = []
    for i, (cin, cout, h, w) in enumerate(_BLOCK_CFG, start=1):
        ho, wo = h // 2, w // 2
        p = params[f'att{i}']
        prep.append((_build_sss(batch, h, ho, hb_order=(i == 3)), True))
        prep.append((_build_r2(w, cin, wo, cout, p['wc']), True))
        prep.append((np.kron(np.eye(2 * wo, dtype=np.float32),
                             np.asarray(p['wa'])), True))
        prep.append((np.tile(np.asarray(p['bc']), 2 * wo)[None, :], False))
        prep.append((np.tile(np.asarray(p['ba']), 2 * wo)[None, :], False))
    hd = params['head']
    # torch's NCHW flatten index is c*3 + h; reorder w1 rows to (h*24 + c).
    perm = np.array([c * 3 + hh for hh in range(3) for c in range(24)])
    prep.append((np.asarray(hd['w1'])[perm], True))
    prep.append((np.asarray(hd['b1'])[None, :], False))
    prep.append((np.asarray(hd['w2']), True))
    prep.append((np.asarray(hd['b2'])[None, :], False))
    prep.append((np.asarray(hd['w3']), True))
    prep.append((np.asarray(hd['b3'])[None, :], False))
    return tuple(
        jnp.asarray(a, dtype=_MXU_DTYPE if is_mxu else jnp.float32)
        for a, is_mxu in prep)


def init_params(key):
    keys = iter(jax.random.split(key, 32))

    def rnd(shape, scale):
        return (scale * jax.random.normal(next(keys), shape)).astype(jnp.float32)

    params = {}
    for i, (cin, cout, _, _) in enumerate(_BLOCK_CFG, start=1):
        params[f'att{i}'] = dict(
            wc=rnd((3, 3, cin, cout), (2.0 / (9 * cin)) ** 0.5),   # HWIO
            bc=rnd((cout,), 0.01),
            wa=rnd((cout, cout), (2.0 / cout) ** 0.5),
            ba=rnd((cout,), 0.01))
    params['head'] = dict(
        w1=rnd((72, 128), (2.0 / 72) ** 0.5), b1=rnd((128,), 0.01),
        w2=rnd((128, 64), (2.0 / 128) ** 0.5), b2=rnd((64,), 0.01),
        w3=rnd((64, _NUM_CLASSES), (2.0 / 64) ** 0.5), b3=rnd((_NUM_CLASSES,), 0.01))
    return params


# ----------------------------------------------------------------------------
# Pure-JAX (XLA) reference with identical semantics, used only for validation.
# ----------------------------------------------------------------------------
def reference_forward(x_nchw, params):
    x = jnp.transpose(x_nchw, (0, 2, 3, 1)).astype(jnp.float32)      # NHWC
    for i in range(1, 4):
        p = params[f'att{i}']
        f = jax.lax.conv_general_dilated(
            x, p['wc'], window_strides=(1, 1), padding='SAME',
            dimension_numbers=('NHWC', 'HWIO', 'NHWC')) + p['bc']
        g = jnp.einsum('bhwc,cd->bhwd', f, p['wa']) + p['ba']
        y = jnp.maximum(f * jax.nn.sigmoid(g), 0.0)
        b, h, w, c = y.shape
        x = jnp.max(y.reshape(b, h // 2, 2, w // 2, 2, c), axis=(2, 4))
    b = x.shape[0]
    flat = jnp.transpose(x, (0, 3, 1, 2)).reshape(b, -1)              # NCHW flatten
    hd = params['head']
    h1 = jnp.maximum(flat @ hd['w1'] + hd['b1'], 0.0)
    h2 = jnp.maximum(h1 @ hd['w2'] + hd['b2'], 0.0)
    return jax.nn.softmax(h2 @ hd['w3'] + hd['b3'], axis=-1)


if __name__ == "__main__":
    key = jax.random.PRNGKey(0)
    kx, kp = jax.random.split(key)
    # NCHW input: channels=4, spatial (24, 8) so three 2x2 pools -> 24ch * 3 * 1 = 72.
    x = jax.random.normal(kx, (2, 4, 24, 8), dtype=jnp.float32)
    params = init_params(kp)
    prep = prepare_params(params, batch=x.shape[0])

    out = attention_model_forward(x, prep)
    out = jax.block_until_ready(out)

    assert out.shape == (2, _NUM_CLASSES)
    assert bool(jnp.all(jnp.isfinite(out)))
    assert bool(jnp.allclose(jnp.sum(out, axis=-1), 1.0, atol=1e-4))

    # Validate the fused matmul reformulation against a plain XLA reference
    # (loose tolerance: kernel MXU operands are bf16, gate uses approx reciprocal).
    ref = reference_forward(x, params)
    assert bool(jnp.max(jnp.abs(out - ref)) < 0.1), "mismatch vs reference"

    print("KERNEL_OK")
</pallas_src>

<mosaic_0001>
module attributes {stable_mosaic.version = 11 : i64} {
  func.func @_fused_forward_kernel(%arg0: memref<48x32xf32, #tpu.memory_space<vmem>>, %arg1: memref<144x48xbf16, #tpu.memory_space<vmem>>, %arg2: memref<96x64xbf16, #tpu.memory_space<vmem>>, %arg3: memref<64x64xbf16, #tpu.memory_space<vmem>>, %arg4: memref<1x64xf32, #tpu.memory_space<vmem>>, %arg5: memref<1x64xf32, #tpu.memory_space<vmem>>, %arg6: memref<72x24xbf16, #tpu.memory_space<vmem>>, %arg7: memref<96x64xbf16, #tpu.memory_space<vmem>>, %arg8: memref<64x64xbf16, #tpu.memory_space<vmem>>, %arg9: memref<1x64xf32, #tpu.memory_space<vmem>>, %arg10: memref<1x64xf32, #tpu.memory_space<vmem>>, %arg11: memref<36x12xbf16, #tpu.memory_space<vmem>>, %arg12: memref<96x48xbf16, #tpu.memory_space<vmem>>, %arg13: memref<48x48xbf16, #tpu.memory_space<vmem>>, %arg14: memref<1x48xf32, #tpu.memory_space<vmem>>, %arg15: memref<1x48xf32, #tpu.memory_space<vmem>>, %arg16: memref<72x128xbf16, #tpu.memory_space<vmem>>, %arg17: memref<1x128xf32, #tpu.memory_space<vmem>>, %arg18: memref<128x64xbf16, #tpu.memory_space<vmem>>, %arg19: memref<1x64xf32, #tpu.memory_space<vmem>>, %arg20: memref<64x10xbf16, #tpu.memory_space<vmem>>, %arg21: memref<1x10xf32, #tpu.memory_space<vmem>>, %arg22: memref<2x10xf32, #tpu.memory_space<vmem>>) attributes {dimension_semantics = [], scalar_prefetch = 0 : i64, scratch_operands = 0 : i64, tpu.core_type = #tpu.core_type<tc>} {
    %c0 = arith.constant 0 : index
    %c0_0 = arith.constant 0 : index
    %0 = vector.load %arg0[%c0, %c0_0] : memref<48x32xf32, #tpu.memory_space<vmem>>, vector<48x32xf32>
    %c0_1 = arith.constant 0 : index
    %c0_2 = arith.constant 0 : index
    %1 = vector.load %arg1[%c0_1, %c0_2] : memref<144x48xbf16, #tpu.memory_space<vmem>>, vector<144x48xbf16>
    %c0_3 = arith.constant 0 : index
    %c0_4 = arith.constant 0 : index
    %2 = vector.load %arg2[%c0_3, %c0_4] : memref<96x64xbf16, #tpu.memory_space<vmem>>, vector<96x64xbf16>
    %c0_5 = arith.constant 0 : index
    %c0_6 = arith.constant 0 : index
    %3 = vector.load %arg3[%c0_5, %c0_6] : memref<64x64xbf16, #tpu.memory_space<vmem>>, vector<64x64xbf16>
    %c0_7 = arith.constant 0 : index
    %c0_8 = arith.constant 0 : index
    %4 = vector.load %arg4[%c0_7, %c0_8] : memref<1x64xf32, #tpu.memory_space<vmem>>, vector<1x64xf32>
    %c0_9 = arith.constant 0 : index
    %c0_10 = arith.constant 0 : index
    %5 = vector.load %arg5[%c0_9, %c0_10] : memref<1x64xf32, #tpu.memory_space<vmem>>, vector<1x64xf32>
    %6 = arith.truncf %0 : vector<48x32xf32> to vector<48x32xbf16>
    %cst = arith.constant dense<0.000000e+00> : vector<144x32xf32>
    %7 = tpu.matmul %1, %6, %cst {dimension_numbers = #tpu.dot_dimension_numbers<[1], [0], [0], [1], [0, 0, 1, 1], [], []>} : vector<144x48xbf16>, vector<48x32xbf16>, vector<144x32xf32> -> vector<144x32xf32>
    %8 = vector.extract_strided_slice %7 {offsets = [0, 0], sizes = [48, 32], strides = [1, 1]} : vector<144x32xf32> to vector<48x32xf32>
    %9 = vector.extract_strided_slice %2 {offsets = [0, 0], sizes = [32, 64], strides = [1, 1]} : vector<96x64xbf16> to vector<32x64xbf16>
    %10 = arith.truncf %8 : vector<48x32xf32> to vector<48x32xbf16>
    %cst_11 = arith.constant dense<0.000000e+00> : vector<48x64xf32>
    %11 = tpu.matmul %10, %9, %cst_11 {dimension_numbers = #tpu.dot_dimension_numbers<[1], [0], [0], [1], [0, 0, 1, 1], [], []>} : vector<48x32xbf16>, vector<32x64xbf16>, vector<48x64xf32> -> vector<48x64xf32>
    %12 = vector.extract_strided_slice %7 {offsets = [48, 0], sizes = [48, 32], strides = [1, 1]} : vector<144x32xf32> to vector<48x32xf32>
    %13 = vector.extract_strided_slice %2 {offsets = [32, 0], sizes = [32, 64], strides = [1, 1]} : vector<96x64xbf16> to vector<32x64xbf16>
    %14 = arith.truncf %12 : vector<48x32xf32> to vector<48x32xbf16>
    %cst_12 = arith.constant dense<0.000000e+00> : vector<48x64xf32>
    %15 = tpu.matmul %14, %13, %cst_12 {dimension_numbers = #tpu.dot_dimension_numbers<[1], [0], [0], [1], [0, 0, 1, 1], [], []>} : vector<48x32xbf16>, vector<32x64xbf16>, vector<48x64xf32> -> vector<48x64xf32>
    %16 = arith.addf %11, %15 : vector<48x64xf32>
    %17 = vector.extract_strided_slice %7 {offsets = [96, 0], sizes = [48, 32], strides = [1, 1]} : vector<144x32xf32> to vector<48x32xf32>
    %18 = vector.extract_strided_slice %2 {offsets = [64, 0], sizes = [32, 64], strides = [1, 1]} : vector<96x64xbf16> to vector<32x64xbf16>
    %19 = arith.truncf %17 : vector<48x32xf32> to vector<48x32xbf16>
    %cst_13 = arith.constant dense<0.000000e+00> : vector<48x64xf32>
    %20 = tpu.matmul %19, %18, %cst_13 {dimension_numbers = #tpu.dot_dimension_numbers<[1], [0], [0], [1], [0, 0, 1, 1], [], []>} : vector<48x32xbf16>, vector<32x64xbf16>, vector<48x64xf32> -> vector<48x64xf32>
    %21 = arith.addf %16, %20 : vector<48x64xf32>
    %22 = vector.broadcast %4 : vector<1x64xf32> to vector<48x64xf32>
    %23 = arith.addf %21, %22 : vector<48x64xf32>
    %24 = arith.truncf %23 : vector<48x64xf32> to vector<48x64xbf16>
    %cst_14 = arith.constant dense<0.000000e+00> : vector<48x64xf32>
    %25 = tpu.matmul %24, %3, %cst_14 {dimension_numbers = #tpu.dot_dimension_numbers<[1], [0], [0], [1], [0, 0, 1, 1], [], []>} : vector<48x64xbf16>, vector<64x64xbf16>, vector<48x64xf32> -> vector<48x64xf32>
    %26 = vector.broadcast %5 : vector<1x64xf32> to vector<48x64xf32>
    %27 = arith.addf %25, %26 : vector<48x64xf32>
    %cst_15 = arith.constant 0.000000e+00 : f32
    %28 = vector.broadcast %cst_15 : f32 to vector<48x64xf32>
    %29 = arith.subf %28, %27 : vector<48x64xf32>
    %30 = math.exp %29 : vector<48x64xf32>
    %cst_16 = arith.constant 1.000000e+00 : f32
    %31 = vector.broadcast %cst_16 : f32 to vector<48x64xf32>
    %32 = arith.addf %31, %30 : vector<48x64xf32>
    %33 = tpu.reciprocal %32 {approx = true} : vector<48x64xf32> -> vector<48x64xf32>
    %34 = arith.mulf %23, %33 : vector<48x64xf32>
    %cst_17 = arith.constant 0.000000e+00 : f32
    %35 = vector.broadcast %cst_17 : f32 to vector<48x64xf32>
    %36 = arith.maximumf %34, %35 : vector<48x64xf32>
    %37 = vector.extract_strided_slice %36 {offsets = [0, 0], sizes = [24, 32], strides = [1, 1]} : vector<48x64xf32> to vector<24x32xf32>
    %38 = vector.extract_strided_slice %36 {offsets = [0, 32], sizes = [24, 32], strides = [1, 1]} : vector<48x64xf32> to vector<24x32xf32>
    %39 = arith.maximumf %37, %38 : vector<24x32xf32>
    %40 = vector.extract_strided_slice %36 {offsets = [24, 0], sizes = [24, 32], strides = [1, 1]} : vector<48x64xf32> to vector<24x32xf32>
    %41 = vector.extract_strided_slice %36 {offsets = [24, 32], sizes = [24, 32], strides = [1, 1]} : vector<48x64xf32> to vector<24x32xf32>
    %42 = arith.maximumf %40, %41 : vector<24x32xf32>
    %43 = arith.maximumf %39, %42 : vector<24x32xf32>
    %c0_18 = arith.constant 0 : index
    %c0_19 = arith.constant 0 : index
    %44 = vector.load %arg6[%c0_18, %c0_19] : memref<72x24xbf16, #tpu.memory_space<vmem>>, vector<72x24xbf16>
    %c0_20 = arith.constant 0 : index
    %c0_21 = arith.constant 0 : index
    %45 = vector.load %arg7[%c0_20, %c0_21] : memref<96x64xbf16, #tpu.memory_space<vmem>>, vector<96x64xbf16>
    %c0_22 = arith.constant 0 : index
    %c0_23 = arith.constant 0 : index
    %46 = vector.load %arg8[%c0_22, %c0_23] : memref<64x64xbf16, #tpu.memory_space<vmem>>, vector<64x64xbf16>
    %c0_24 = arith.constant 0 : index
    %c0_25 = arith.constant 0 : index
    %47 = vector.load %arg9[%c0_24, %c0_25] : memref<1x64xf32, #tpu.memory_space<vmem>>, vector<1x64xf32>
    %c0_26 = arith.constant 0 : index
    %c0_27 = arith.constant 0 : index
    %48 = vector.load %arg10[%c0_26, %c0_27] : memref<1x64xf32, #tpu.memory_space<vmem>>, vector<1x64xf32>
    %49 = arith.truncf %43 : vector<24x32xf32> to vector<24x32xbf16>
    %cst_28 = arith.constant dense<0.000000e+00> : vector<72x32xf32>
    %50 = tpu.matmul %44, %49, %cst_28 {dimension_numbers = #tpu.dot_dimension_numbers<[1], [0], [0], [1], [0, 0, 1, 1], [], []>} : vector<72x24xbf16>, vector<24x32xbf16>, vector<72x32xf32> -> vector<72x32xf32>
    %51 = vector.extract_strided_slice %50 {offsets = [0, 0], sizes = [24, 32], strides = [1, 1]} : vector<72x32xf32> to vector<24x32xf32>
    %52 = vector.extract_strided_slice %45 {offsets = [0, 0], sizes = [32, 64], strides = [1, 1]} : vector<96x64xbf16> to vector<32x64xbf16>
    %53 = arith.truncf %51 : vector<24x32xf32> to vector<24x32xbf16>
    %cst_29 = arith.constant dense<0.000000e+00> : vector<24x64xf32>
    %54 = tpu.matmul %53, %52, %cst_29 {dimension_numbers = #tpu.dot_dimension_numbers<[1], [0], [0], [1], [0, 0, 1, 1], [], []>} : vector<24x32xbf16>, vector<32x64xbf16>, vector<24x64xf32> -> vector<24x64xf32>
    %55 = vector.extract_strided_slice %50 {offsets = [24, 0], sizes = [24, 32], strides = [1, 1]} : vector<72x32xf32> to vector<24x32xf32>
    %56 = vector.extract_strided_slice %45 {offsets = [32, 0], sizes = [32, 64], strides = [1, 1]} : vector<96x64xbf16> to vector<32x64xbf16>
    %57 = arith.truncf %55 : vector<24x32xf32> to vector<24x32xbf16>
    %cst_30 = arith.constant dense<0.000000e+00> : vector<24x64xf32>
    %58 = tpu.matmul %57, %56, %cst_30 {dimension_numbers = #tpu.dot_dimension_numbers<[1], [0], [0], [1], [0, 0, 1, 1], [], []>} : vector<24x32xbf16>, vector<32x64xbf16>, vector<24x64xf32> -> vector<24x64xf32>
    %59 = arith.addf %54, %58 : vector<24x64xf32>
    %60 = vector.extract_strided_slice %50 {offsets = [48, 0], sizes = [24, 32], strides = [1, 1]} : vector<72x32xf32> to vector<24x32xf32>
    %61 = vector.extract_strided_slice %45 {offsets = [64, 0], sizes = [32, 64], strides = [1, 1]} : vector<96x64xbf16> to vector<32x64xbf16>
    %62 = arith.truncf %60 : vector<24x32xf32> to vector<24x32xbf16>
    %cst_31 = arith.constant dense<0.000000e+00> : vector<24x64xf32>
    %63 = tpu.matmul %62, %61, %cst_31 {dimension_numbers = #tpu.dot_dimension_numbers<[1], [0], [0], [1], [0, 0, 1, 1], [], []>} : vector<24x32xbf16>, vector<32x64xbf16>, vector<24x64xf32> -> vector<24x64xf32>
    %64 = arith.addf %59, %63 : vector<24x64xf32>
    %65 = vector.broadcast %47 : vector<1x64xf32> to vector<24x64xf32>
    %66 = arith.addf %64, %65 : vector<24x64xf32>
    %67 = arith.truncf %66 : vector<24x64xf32> to vector<24x64xbf16>
    %cst_32 = arith.constant dense<0.000000e+00> : vector<24x64xf32>
    %68 = tpu.matmul %67, %46, %cst_32 {dimension_numbers = #tpu.dot_dimension_numbers<[1], [0], [0], [1], [0, 0, 1, 1], [], []>} : vector<24x64xbf16>, vector<64x64xbf16>, vector<24x64xf32> -> vector<24x64xf32>
    %69 = vector.broadcast %48 : vector<1x64xf32> to vector<24x64xf32>
    %70 = arith.addf %68, %69 : vector<24x64xf32>
    %cst_33 = arith.constant 0.000000e+00 : f32
    %71 = vector.broadcast %cst_33 : f32 to vector<24x64xf32>
    %72 = arith.subf %71, %70 : vector<24x64xf32>
    %73 = math.exp %72 : vector<24x64xf32>
    %cst_34 = arith.constant 1.000000e+00 : f32
    %74 = vector.broadcast %cst_34 : f32 to vector<24x64xf32>
    %75 = arith.addf %74, %73 : vector<24x64xf32>
    %76 = tpu.reciprocal %75 {approx = true} : vector<24x64xf32> -> vector<24x64xf32>
    %77 = arith.mulf %66, %76 : vector<24x64xf32>
    %cst_35 = arith.constant 0.000000e+00 : f32
    %78 = vector.broadcast %cst_35 : f32 to vector<24x64xf32>
    %79 = arith.maximumf %77, %78 : vector<24x64xf32>
    %80 = vector.extract_strided_slice %79 {offsets = [0, 0], sizes = [12, 32], strides = [1, 1]} : vector<24x64xf32> to vector<12x32xf32>
    %81 = vector.extract_strided_slice %79 {offsets = [0, 32], sizes = [12, 32], strides = [1, 1]} : vector<24x64xf32> to vector<12x32xf32>
    %82 = arith.maximumf %80, %81 : vector<12x32xf32>
    %83 = vector.extract_strided_slice %79 {offsets = [12, 0], sizes = [12, 32], strides = [1, 1]} : vector<24x64xf32> to vector<12x32xf32>
    %84 = vector.extract_strided_slice %79 {offsets = [12, 32], sizes = [12, 32], strides = [1, 1]} : vector<24x64xf32> to vector<12x32xf32>
    %85 = arith.maximumf %83, %84 : vector<12x32xf32>
    %86 = arith.maximumf %82, %85 : vector<12x32xf32>
    %c0_36 = arith.constant 0 : index
    %c0_37 = arith.constant 0 : index
    %87 = vector.load %arg11[%c0_36, %c0_37] : memref<36x12xbf16, #tpu.memory_space<vmem>>, vector<36x12xbf16>
    %c0_38 = arith.constant 0 : index
    %c0_39 = arith.constant 0 : index
    %88 = vector.load %arg12[%c0_38, %c0_39] : memref<96x48xbf16, #tpu.memory_space<vmem>>, vector<96x48xbf16>
    %c0_40 = arith.constant 0 : index
    %c0_41 = arith.constant 0 : index
    %89 = vector.load %arg13[%c0_40, %c0_41] : memref<48x48xbf16, #tpu.memory_space<vmem>>, vector<48x48xbf16>
    %c0_42 = arith.constant 0 : index
    %c0_43 = arith.constant 0 : index
    %90 = vector.load %arg14[%c0_42, %c0_43] : memref<1x48xf32, #tpu.memory_space<vmem>>, vector<1x48xf32>
    %c0_44 = arith.constant 0 : index
    %c0_45 = arith.constant 0 : index
    %91 = vector.load %arg15[%c0_44, %c0_45] : memref<1x48xf32, #tpu.memory_space<vmem>>, vector<1x48xf32>
    %92 = arith.truncf %86 : vector<12x32xf32> to vector<12x32xbf16>
    %cst_46 = arith.constant dense<0.000000e+00> : vector<36x32xf32>
    %93 = tpu.matmul %87, %92, %cst_46 {dimension_numbers = #tpu.dot_dimension_numbers<[1], [0], [0], [1], [0, 0, 1, 1], [], []>} : vector<36x12xbf16>, vector<12x32xbf16>, vector<36x32xf32> -> vector<36x32xf32>
    %94 = vector.extract_strided_slice %93 {offsets = [0, 0], sizes = [12, 32], strides = [1, 1]} : vector<36x32xf32> to vector<12x32xf32>
    %95 = vector.extract_strided_slice %88 {offsets = [0, 0], sizes = [32, 48], strides = [1, 1]} : vector<96x48xbf16> to vector<32x48xbf16>
    %96 = arith.truncf %94 : vector<12x32xf32> to vector<12x32xbf16>
    %cst_47 = arith.constant dense<0.000000e+00> : vector<12x48xf32>
    %97 = tpu.matmul %96, %95, %cst_47 {dimension_numbers = #tpu.dot_dimension_numbers<[1], [0], [0], [1], [0, 0, 1, 1], [], []>} : vector<12x32xbf16>, vector<32x48xbf16>, vector<12x48xf32> -> vector<12x48xf32>
    %98 = vector.extract_strided_slice %93 {offsets = [12, 0], sizes = [12, 32], strides = [1, 1]} : vector<36x32xf32> to vector<12x32xf32>
    %99 = vector.extract_strided_slice %88 {offsets = [32, 0], sizes = [32, 48], strides = [1, 1]} : vector<96x48xbf16> to vector<32x48xbf16>
    %100 = arith.truncf %98 : vector<12x32xf32> to vector<12x32xbf16>
    %cst_48 = arith.constant dense<0.000000e+00> : vector<12x48xf32>
    %101 = tpu.matmul %100, %99, %cst_48 {dimension_numbers = #tpu.dot_dimension_numbers<[1], [0], [0], [1], [0, 0, 1, 1], [], []>} : vector<12x32xbf16>, vector<32x48xbf16>, vector<12x48xf32> -> vector<12x48xf32>
    %102 = arith.addf %97, %101 : vector<12x48xf32>
    %103 = vector.extract_strided_slice %93 {offsets = [24, 0], sizes = [12, 32], strides = [1, 1]} : vector<36x32xf32> to vector<12x32xf32>
    %104 = vector.extract_strided_slice %88 {offsets = [64, 0], sizes = [32, 48], strides = [1, 1]} : vector<96x48xbf16> to vector<32x48xbf16>
    %105 = arith.truncf %103 : vector<12x32xf32> to vector<12x32xbf16>
    %cst_49 = arith.constant dense<0.000000e+00> : vector<12x48xf32>
    %106 = tpu.matmul %105, %104, %cst_49 {dimension_numbers = #tpu.dot_dimension_numbers<[1], [0], [0], [1], [0, 0, 1, 1], [], []>} : vector<12x32xbf16>, vector<32x48xbf16>, vector<12x48xf32> -> vector<12x48xf32>
    %107 = arith.addf %102, %106 : vector<12x48xf32>
    %108 = vector.broadcast %90 : vector<1x48xf32> to vector<12x48xf32>
    %109 = arith.addf %107, %108 : vector<12x48xf32>
    %110 = arith.truncf %109 : vector<12x48xf32> to vector<12x48xbf16>
    %cst_50 = arith.constant dense<0.000000e+00> : vector<12x48xf32>
    %111 = tpu.matmul %110, %89, %cst_50 {dimension_numbers = #tpu.dot_dimension_numbers<[1], [0], [0], [1], [0, 0, 1, 1], [], []>} : vector<12x48xbf16>, vector<48x48xbf16>, vector<12x48xf32> -> vector<12x48xf32>
    %112 = vector.broadcast %91 : vector<1x48xf32> to vector<12x48xf32>
    %113 = arith.addf %111, %112 : vector<12x48xf32>
    %cst_51 = arith.constant 0.000000e+00 : f32
    %114 = vector.broadcast %cst_51 : f32 to vector<12x48xf32>
    %115 = arith.subf %114, %113 : vector<12x48xf32>
    %116 = math.exp %115 : vector<12x48xf32>
    %cst_52 = arith.constant 1.000000e+00 : f32
    %117 = vector.broadcast %cst_52 : f32 to vector<12x48xf32>
    %118 = arith.addf %117, %116 : vector<12x48xf32>
    %119 = tpu.reciprocal %118 {approx = true} : vector<12x48xf32> -> vector<12x48xf32>
    %120 = arith.mulf %109, %119 : vector<12x48xf32>
    %cst_53 = arith.constant 0.000000e+00 : f32
    %121 = vector.broadcast %cst_53 : f32 to vector<12x48xf32>
    %122 = arith.maximumf %120, %121 : vector<12x48xf32>
    %123 = vector.extract_strided_slice %122 {offsets = [0, 0], sizes = [6, 24], strides = [1, 1]} : vector<12x48xf32> to vector<6x24xf32>
    %124 = vector.extract_strided_slice %122 {offsets = [0, 24], sizes = [6, 24], strides = [1, 1]} : vector<12x48xf32> to vector<6x24xf32>
    %125 = arith.maximumf %123, %124 : vector<6x24xf32>
    %126 = vector.extract_strided_slice %122 {offsets = [6, 0], sizes = [6, 24], strides = [1, 1]} : vector<12x48xf32> to vector<6x24xf32>
    %127 = vector.extract_strided_slice %122 {offsets = [6, 24], sizes = [6, 24], strides = [1, 1]} : vector<12x48xf32> to vector<6x24xf32>
    %128 = arith.maximumf %126, %127 : vector<6x24xf32>
    %129 = arith.maximumf %125, %128 : vector<6x24xf32>
    %c0_54 = arith.constant 0 : index
    %c0_55 = arith.constant 0 : index
    %130 = vector.load %arg17[%c0_54, %c0_55] : memref<1x128xf32, #tpu.memory_space<vmem>>, vector<1x128xf32>
    %131 = vector.extract_strided_slice %129 {offsets = [0, 0], sizes = [2, 24], strides = [1, 1]} : vector<6x24xf32> to vector<2x24xf32>
    %c0_56 = arith.constant 0 : index
    %c0_57 = arith.constant 0 : index
    %132 = vector.load %arg16[%c0_56, %c0_57] : memref<72x128xbf16, #tpu.memory_space<vmem>>, vector<24x128xbf16>
    %133 = arith.truncf %131 : vector<2x24xf32> to vector<2x24xbf16>
    %cst_58 = arith.constant dense<0.000000e+00> : vector<2x128xf32>
    %134 = tpu.matmul %133, %132, %cst_58 {dimension_numbers = #tpu.dot_dimension_numbers<[1], [0], [0], [1], [0, 0, 1, 1], [], []>} : vector<2x24xbf16>, vector<24x128xbf16>, vector<2x128xf32> -> vector<2x128xf32>
    %135 = vector.broadcast %130 : vector<1x128xf32> to vector<2x128xf32>
    %136 = arith.addf %135, %134 : vector<2x128xf32>
    %137 = vector.extract_strided_slice %129 {offsets = [2, 0], sizes = [2, 24], strides = [1, 1]} : vector<6x24xf32> to vector<2x24xf32>
    %c24 = arith.constant 24 : index
    %c0_59 = arith.constant 0 : index
    %138 = vector.load %arg16[%c24, %c0_59] : memref<72x128xbf16, #tpu.memory_space<vmem>>, vector<24x128xbf16>
    %139 = arith.truncf %137 : vector<2x24xf32> to vector<2x24xbf16>
    %cst_60 = arith.constant dense<0.000000e+00> : vector<2x128xf32>
    %140 = tpu.matmul %139, %138, %cst_60 {dimension_numbers = #tpu.dot_dimension_numbers<[1], [0], [0], [1], [0, 0, 1, 1], [], []>} : vector<2x24xbf16>, vector<24x128xbf16>, vector<2x128xf32> -> vector<2x128xf32>
    %141 = arith.addf %136, %140 : vector<2x128xf32>
    %142 = vector.extract_strided_slice %129 {offsets = [4, 0], sizes = [2, 24], strides = [1, 1]} : vector<6x24xf32> to vector<2x24xf32>
    %c48 = arith.constant 48 : index
    %c0_61 = arith.constant 0 : index
    %143 = vector.load %arg16[%c48, %c0_61] : memref<72x128xbf16, #tpu.memory_space<vmem>>, vector<24x128xbf16>
    %144 = arith.truncf %142 : vector<2x24xf32> to vector<2x24xbf16>
    %cst_62 = arith.constant dense<0.000000e+00> : vector<2x128xf32>
    %145 = tpu.matmul %144, %143, %cst_62 {dimension_numbers = #tpu.dot_dimension_numbers<[1], [0], [0], [1], [0, 0, 1, 1], [], []>} : vector<2x24xbf16>, vector<24x128xbf16>, vector<2x128xf32> -> vector<2x128xf32>
    %146 = arith.addf %141, %145 : vector<2x128xf32>
    %cst_63 = arith.constant 0.000000e+00 : f32
    %147 = vector.broadcast %cst_63 : f32 to vector<2x128xf32>
    %148 = arith.maximumf %146, %147 : vector<2x128xf32>
    %c0_64 = arith.constant 0 : index
    %c0_65 = arith.constant 0 : index
    %149 = vector.load %arg18[%c0_64, %c0_65] : memref<128x64xbf16, #tpu.memory_space<vmem>>, vector<128x64xbf16>
    %150 = arith.truncf %148 : vector<2x128xf32> to vector<2x128xbf16>
    %cst_66 = arith.constant dense<0.000000e+00> : vector<2x64xf32>
    %151 = tpu.matmul %150, %149, %cst_66 {dimension_numbers = #tpu.dot_dimension_numbers<[1], [0], [0], [1], [0, 0, 1, 1], [], []>} : vector<2x128xbf16>, vector<128x64xbf16>, vector<2x64xf32> -> vector<2x64xf32>
    %c0_67 = arith.constant 0 : index
    %c0_68 = arith.constant 0 : index
    %152 = vector.load %arg19[%c0_67, %c0_68] : memref<1x64xf32, #tpu.memory_space<vmem>>, vector<1x64xf32>
    %153 = vector.broadcast %152 : vector<1x64xf32> to vector<2x64xf32>
    %154 = arith.addf %151, %153 : vector<2x64xf32>
    %cst_69 = arith.constant 0.000000e+00 : f32
    %155 = vector.broadcast %cst_69 : f32 to vector<2x64xf32>
    %156 = arith.maximumf %154, %155 : vector<2x64xf32>
    %c0_70 = arith.constant 0 : index
    %c0_71 = arith.constant 0 : index
    %157 = vector.load %arg20[%c0_70, %c0_71] : memref<64x10xbf16, #tpu.memory_space<vmem>>, vector<64x10xbf16>
    %158 = arith.truncf %156 : vector<2x64xf32> to vector<2x64xbf16>
    %cst_72 = arith.constant dense<0.000000e+00> : vector<2x10xf32>
    %159 = tpu.matmul %158, %157, %cst_72 {dimension_numbers = #tpu.dot_dimension_numbers<[1], [0], [0], [1], [0, 0, 1, 1], [], []>} : vector<2x64xbf16>, vector<64x10xbf16>, vector<2x10xf32> -> vector<2x10xf32>
    %c0_73 = arith.constant 0 : index
    %c0_74 = arith.constant 0 : index
    %160 = vector.load %arg21[%c0_73, %c0_74] : memref<1x10xf32, #tpu.memory_space<vmem>>, vector<1x10xf32>
    %161 = vector.broadcast %160 : vector<1x10xf32> to vector<2x10xf32>
    %162 = arith.addf %159, %161 : vector<2x10xf32>
    %cst_75 = arith.constant dense<0xFF800000> : vector<2xf32>
    %163 = vector.multi_reduction <maximumf>, %162, %cst_75 [1] : vector<2x10xf32> to vector<2xf32>
    %164 = vector.shape_cast %163 : vector<2xf32> to vector<2x1xf32>
    %165 = vector.broadcast %164 : vector<2x1xf32> to vector<2x10xf32>
    %166 = arith.subf %162, %165 : vector<2x10xf32>
    %167 = math.exp %166 : vector<2x10xf32>
    %cst_76 = arith.constant dense<0.000000e+00> : vector<2xf32>
    %168 = vector.multi_reduction <add>, %167, %cst_76 [1] : vector<2x10xf32> to vector<2xf32>
    %169 = vector.shape_cast %168 : vector<2xf32> to vector<2x1xf32>
    %170 = vector.broadcast %169 : vector<2x1xf32> to vector<2x10xf32>
    %171 = arith.divf %167, %170 : vector<2x10xf32>
    %c0_77 = arith.constant 0 : index
    %c0_78 = arith.constant 0 : index
    %172 = vector.load %arg22[%c0_77, %c0_78] : memref<2x10xf32, #tpu.memory_space<vmem>>, vector<2x10xf32>
    tpu.vector_store %arg22[%c0_77, %c0_78], %171 {strides = array<i32>} : memref<2x10xf32, #tpu.memory_space<vmem>>, vector<2x10xf32>,
    return
  }
}

</mosaic_0001>

<llo_original>
// kernel: attention_model_forward.1
$region0: #{attention_model_forward.1}
  #allocation0 [shape = 'u32[]', space=smem, size = 0x4, offset = 0x4, fixed_abs, tag = 'smem constant byte address 0x4 - core index']
  #allocation1 [shape = 'u32[72,128]{1,0:T(1,128)}', space=vmem, size = 0x9000, scoped, tag = 'internal scratch']
  %s0 = inlined_call_operand.vmem [shape: f32[48,32], index: 0, kind: input, shape index: {}]
  %s1 = inlined_call_operand.vmem [shape: bf16[144,48], index: 1, kind: input, shape index: {}]
  %s2 = inlined_call_operand.vmem [shape: bf16[96,64], index: 2, kind: input, shape index: {}]
  %s3 = inlined_call_operand.vmem [shape: bf16[64,64], index: 3, kind: input, shape index: {}]
  %s4 = inlined_call_operand.vmem [shape: f32[1,64], index: 4, kind: input, shape index: {}]
  %s5 = inlined_call_operand.vmem [shape: f32[1,64], index: 5, kind: input, shape index: {}]
  %s6 = inlined_call_operand.vmem [shape: bf16[72,24], index: 6, kind: input, shape index: {}]
  %s7 = inlined_call_operand.vmem [shape: bf16[96,64], index: 7, kind: input, shape index: {}]
  %s8 = inlined_call_operand.vmem [shape: bf16[64,64], index: 8, kind: input, shape index: {}]
  %s9 = inlined_call_operand.vmem [shape: f32[1,64], index: 9, kind: input, shape index: {}]
  %s10 = inlined_call_operand.vmem [shape: f32[1,64], index: 10, kind: input, shape index: {}]
  %s11 = inlined_call_operand.vmem [shape: bf16[36,12], index: 11, kind: input, shape index: {}]
  %s12 = inlined_call_operand.vmem [shape: bf16[96,48], index: 12, kind: input, shape index: {}]
  %s13 = inlined_call_operand.vmem [shape: bf16[48,48], index: 13, kind: input, shape index: {}]
  %s14 = inlined_call_operand.vmem [shape: f32[1,48], index: 14, kind: input, shape index: {}]
  %s15 = inlined_call_operand.vmem [shape: f32[1,48], index: 15, kind: input, shape index: {}]
  %s16 = inlined_call_operand.vmem [shape: bf16[72,128], index: 16, kind: input, shape index: {}]
  %s17 = inlined_call_operand.vmem [shape: f32[1,128], index: 17, kind: input, shape index: {}]
  %s18 = inlined_call_operand.vmem [shape: bf16[128,64], index: 18, kind: input, shape index: {}]
  %s19 = inlined_call_operand.vmem [shape: f32[1,64], index: 19, kind: input, shape index: {}]
  %s20 = inlined_call_operand.vmem [shape: bf16[64,10], index: 20, kind: input, shape index: {}]
  %s21 = inlined_call_operand.vmem [shape: f32[1,10], index: 21, kind: input, shape index: {}]
  %s22 = inlined_call_operand.hbm [shape: f32[2,10], index: 22, kind: output, shape index: {}]
  %s23 = sld [smem:[#allocation0]]
  $region98: #{attention_model_forward.1} parent=0
    _
  %s25 = ssub.s32 1, %s23
  %s26 = scalar_select 0, %s25, %s23
  $region1: #{attention_model_forward.1} parent=0
    #allocation2 [shape = 'u8[1024]{0}', space=vmem, size = 0x400, scoped, tag = 'output window, operand 0, single buffered']
    #allocation3 [shape = 's32[1]{0}', space=sflag, size = 0x4, scoped, tag = 'scoped memory for attention_model_forward.1']
    %27 = vsyncpa [#allocation3], 0
    // Predicated region
    $region2: #{attention_model_forward.1} parent=1 // pred_check
      _
    $region3: #{attention_model_forward.1} parent=1 // pred_check_branch
      %29 = sbr.rel (0) target = $region5
    $region4: #{attention_model_forward.1} parent=1 // pred_region
      _
    $region5: #{attention_model_forward.1} parent=1 // pred_fallthru
      _
    // Predicated region
    $region6: #{attention_model_forward.1} parent=1 // pred_check
      _
    $region7: #{attention_model_forward.1} parent=1 // pred_check_branch
      %31 = sbr.rel (0) target = $region9
    $region8: #{attention_model_forward.1} parent=1 // pred_region
      _
    $region9: #{attention_model_forward.1} parent=1 // pred_fallthru
      _
    // Predicated region
    $region10: #{attention_model_forward.1} parent=1 // pred_check
      _
    $region11: #{attention_model_forward.1} parent=1 // pred_check_branch
      %33 = sbr.rel (0) target = $region13
    $region12: #{attention_model_forward.1} parent=1 // pred_region
      _
    $region13: #{attention_model_forward.1} parent=1 // pred_fallthru
      _
    // Predicated region
    $region14: #{attention_model_forward.1} parent=1 // pred_check
      _
    $region15: #{attention_model_forward.1} parent=1 // pred_check_branch
      %35 = sbr.rel (0) target = $region17
    $region16: #{attention_model_forward.1} parent=1 // pred_region
      _
    $region17: #{attention_model_forward.1} parent=1 // pred_fallthru
      _
    // Predicated region
    $region18: #{attention_model_forward.1} parent=1 // pred_check
      _
    $region19: #{attention_model_forward.1} parent=1 // pred_check_branch
      %37 = sbr.rel (0) target = $region21
    $region20: #{attention_model_forward.1} parent=1 // pred_region
      _
    $region21: #{attention_model_forward.1} parent=1 // pred_fallthru
      _
    // Predicated region
    $region22: #{attention_model_forward.1} parent=1 // pred_check
      _
    $region23: #{attention_model_forward.1} parent=1 // pred_check_branch
      %39 = sbr.rel (0) target = $region25
    $region24: #{attention_model_forward.1} parent=1 // pred_region
      _
    $region25: #{attention_model_forward.1} parent=1 // pred_fallthru
      _
    // Predicated region
    $region26: #{attention_model_forward.1} parent=1 // pred_check
      _
    $region27: #{attention_model_forward.1} parent=1 // pred_check_branch
      %41 = sbr.rel (0) target = $region29
    $region28: #{attention_model_forward.1} parent=1 // pred_region
      _
    $region29: #{attention_model_forward.1} parent=1 // pred_fallthru
      _
    // Predicated region
    $region30: #{attention_model_forward.1} parent=1 // pred_check
      _
    $region31: #{attention_model_forward.1} parent=1 // pred_check_branch
      %43 = sbr.rel (0) target = $region33
    $region32: #{attention_model_forward.1} parent=1 // pred_region
      _
    $region33: #{attention_model_forward.1} parent=1 // pred_fallthru
      _
    // Predicated region
    $region34: #{attention_model_forward.1} parent=1 // pred_check
      _
    $region35: #{attention_model_forward.1} parent=1 // pred_check_branch
      %45 = sbr.rel (0) target = $region37
    $region36: #{attention_model_forward.1} parent=1 // pred_region
      _
    $region37: #{attention_model_forward.1} parent=1 // pred_fallthru
      _
    // Predicated region
    $region38: #{attention_model_forward.1} parent=1 // pred_check
      _
    $region39: #{attention_model_forward.1} parent=1 // pred_check_branch
      %47 = sbr.rel (0) target = $region41
    $region40: #{attention_model_forward.1} parent=1 // pred_region
      _
    $region41: #{attention_model_forward.1} parent=1 // pred_fallthru
      _
    // Predicated region
    $region42: #{attention_model_forward.1} parent=1 // pred_check
      _
    $region43: #{attention_model_forward.1} parent=1 // pred_check_branch
      %49 = sbr.rel (0) target = $region45
    $region44: #{attention_model_forward.1} parent=1 // pred_region
      _
    $region45: #{attention_model_forward.1} parent=1 // pred_fallthru
      _
    // Predicated region
    $region46: #{attention_model_forward.1} parent=1 // pred_check
      _
    $region47: #{attention_model_forward.1} parent=1 // pred_check_branch
      %51 = sbr.rel (0) target = $region49
    $region48: #{attention_model_forward.1} parent=1 // pred_region
      _
    $region49: #{attention_model_forward.1} parent=1 // pred_fallthru
      _
    // Predicated region
    $region50: #{attention_model_forward.1} parent=1 // pred_check
      _
    $region51: #{attention_model_forward.1} parent=1 // pred_check_branch
      %53 = sbr.rel (0) target = $region53
    $region52: #{attention_model_forward.1} parent=1 // pred_region
      _
    $region53: #{attention_model_forward.1} parent=1 // pred_fallthru
      _
    // Predicated region
    $region54: #{attention_model_forward.1} parent=1 // pred_check
      _
    $region55: #{attention_model_forward.1} parent=1 // pred_check_branch
      %55 = sbr.rel (0) target = $region57
    $region56: #{attention_model_forward.1} parent=1 // pred_region
      _
    $region57: #{attention_model_forward.1} parent=1 // pred_fallthru
      _
    // Predicated region
    $region58: #{attention_model_forward.1} parent=1 // pred_check
      _
    $region59: #{attention_model_forward.1} parent=1 // pred_check_branch
      %57 = sbr.rel (0) target = $region61
    $region60: #{attention_model_forward.1} parent=1 // pred_region
      _
    $region61: #{attention_model_forward.1} parent=1 // pred_fallthru
      _
    // Predicated region
    $region62: #{attention_model_forward.1} parent=1 // pred_check
      _
    $region63: #{attention_model_forward.1} parent=1 // pred_check_branch
      %59 = sbr.rel (0) target = $region65
    $region64: #{attention_model_forward.1} parent=1 // pred_region
      _
    $region65: #{attention_model_forward.1} parent=1 // pred_fallthru
      _
    // Predicated region
    $region66: #{attention_model_forward.1} parent=1 // pred_check
      _
    $region67: #{attention_model_forward.1} parent=1 // pred_check_branch
      %61 = sbr.rel (0) target = $region69
    $region68: #{attention_model_forward.1} parent=1 // pred_region
      _
    $region69: #{attention_model_forward.1} parent=1 // pred_fallthru
      _
    // Predicated region
    $region70: #{attention_model_forward.1} parent=1 // pred_check
      _
    $region71: #{attention_model_forward.1} parent=1 // pred_check_branch
      %63 = sbr.rel (0) target = $region73
    $region72: #{attention_model_forward.1} parent=1 // pred_region
      _
    $region73: #{attention_model_forward.1} parent=1 // pred_fallthru
      _
    // Predicated region
    $region74: #{attention_model_forward.1} parent=1 // pred_check
      _
    $region75: #{attention_model_forward.1} parent=1 // pred_check_branch
      %65 = sbr.rel (0) target = $region77
    $region76: #{attention_model_forward.1} parent=1 // pred_region
      _
    $region77: #{attention_model_forward.1} parent=1 // pred_fallthru
      _
    // Predicated region
    $region78: #{attention_model_forward.1} parent=1 // pred_check
      _
    $region79: #{attention_model_forward.1} parent=1 // pred_check_branch
      %67 = sbr.rel (0) target = $region81
    $region80: #{attention_model_forward.1} parent=1 // pred_region
      _
    $region81: #{attention_model_forward.1} parent=1 // pred_fallthru
      _
    // Predicated region
    $region82: #{attention_model_forward.1} parent=1 // pred_check
      _
    $region83: #{attention_model_forward.1} parent=1 // pred_check_branch
      %69 = sbr.rel (0) target = $region85
    $region84: #{attention_model_forward.1} parent=1 // pred_region
      _
    $region85: #{attention_model_forward.1} parent=1 // pred_fallthru
      _
    // Predicated region
    $region86: #{attention_model_forward.1} parent=1 // pred_check
      _
    $region87: #{attention_model_forward.1} parent=1 // pred_check_branch
      %71 = sbr.rel (0) target = $region89
    $region88: #{attention_model_forward.1} parent=1 // pred_region
      _
    $region89: #{attention_model_forward.1} parent=1 // pred_fallthru
      _
    %v73 = vld [vmem:[%s0] sm:$0xff]
    %v74 = vld [vmem:[%s0 + $0x8] sm:$0xff]
    %v75 = vld [vmem:[%s0 + $0x10] sm:$0xff]
    %v76 = vld [vmem:[%s0 + $0x18] sm:$0xff]
    %v77 = vld [vmem:[%s0 + $0x20] sm:$0xff]
    %v78 = vld [vmem:[%s0 + $0x28] sm:$0xff]
    %v79 = vld [vmem:[%s1] sm:$0xf]
    %v80 = vld [vmem:[%s1 + $0x4] sm:$0xf]
    %v81 = vld [vmem:[%s1 + $0x8] sm:$0xf]
    %v82 = vld [vmem:[%s1 + $0xc] sm:$0xf]
    %v83 = vld [vmem:[%s1 + $0x10] sm:$0xf]
    %v84 = vld [vmem:[%s1 + $0x14] sm:$0xf]
    %v85 = vld [vmem:[%s1 + $0x18] sm:$0xf]
    %v86 = vld [vmem:[%s1 + $0x1c] sm:$0xf]
    %v87 = vld [vmem:[%s1 + $0x20] sm:$0xf]
    %v88 = vld [vmem:[%s1 + $0x24] sm:$0xf]
    %v89 = vld [vmem:[%s1 + $0x28] sm:$0xf]
    %v90 = vld [vmem:[%s1 + $0x2c] sm:$0xf]
    %v91 = vld [vmem:[%s1 + $0x30] sm:$0xf]
    %v92 = vld [vmem:[%s1 + $0x34] sm:$0xf]
    %v93 = vld [vmem:[%s1 + $0x38] sm:$0xf]
    %v94 = vld [vmem:[%s1 + $0x3c] sm:$0xf]
    %v95 = vld [vmem:[%s1 + $0x40] sm:$0xf]
    %v96 = vld [vmem:[%s1 + $0x44] sm:$0xf]
    %v97 = vld [vmem:[%s2] sm:$0xf]
    %v98 = vld [vmem:[%s2 + $0x4] sm:$0xf]
    %v99 = vld [vmem:[%s2 + $0x8] sm:$0xf]
    %v100 = vld [vmem:[%s2 + $0xc] sm:$0xf]
    %v101 = vld [vmem:[%s2 + $0x10] sm:$0xf]
    %v102 = vld [vmem:[%s2 + $0x14] sm:$0xf]
    %v103 = vld [vmem:[%s2 + $0x18] sm:$0xf]
    %v104 = vld [vmem:[%s2 + $0x1c] sm:$0xf]
    %v105 = vld [vmem:[%s2 + $0x20] sm:$0xf]
    %v106 = vld [vmem:[%s2 + $0x24] sm:$0xf]
    %v107 = vld [vmem:[%s2 + $0x28] sm:$0xf]
    %v108 = vld [vmem:[%s2 + $0x2c] sm:$0xf]
    %v109 = vld [vmem:[%s3] sm:$0xf]
    %v110 = vld [vmem:[%s3 + $0x4] sm:$0xf]
    %v111 = vld [vmem:[%s3 + $0x8] sm:$0xf]
    %v112 = vld [vmem:[%s3 + $0xc] sm:$0xf]
    %v113 = vld [vmem:[%s3 + $0x10] sm:$0xf]
    %v114 = vld [vmem:[%s3 + $0x14] sm:$0xf]
    %v115 = vld [vmem:[%s3 + $0x18] sm:$0xf]
    %v116 = vld [vmem:[%s3 + $0x1c] sm:$0xf]
    %v117 = vld [vmem:[%s4] sm:$0x1]
    %v118 = vld [vmem:[%s5] sm:$0x1]
    %v119 = vpack.c.bf16 %v74, %v73
    %v120 = vpack.c.bf16 %v76, %v75
    %v121 = vpack.c.bf16 %v78, %v77
    %v140 = vunpack.c.l.b16 %v79
    %v141 = vunpack.c.l.b16 %v80
    %v142 = vunpack.c.l.b16 %v81
    %v143 = vunpack.c.l.b16 %v82
    %v144 = vunpack.c.l.b16 %v83
    %v145 = vunpack.c.l.b16 %v84
    %v146 = vunpack.c.l.b16 %v85
    %v147 = vunpack.c.l.b16 %v86
    %v148 = vunpack.c.l.b16 %v87
    %v149 = vunpack.c.l.b16 %v88
    %v150 = vunpack.c.l.b16 %v89
    %v151 = vunpack.c.l.b16 %v90
    %v152 = vunpack.c.l.b16 %v91
    %v153 = vunpack.c.l.b16 %v92
    %v154 = vunpack.c.l.b16 %v93
    %v155 = vunpack.c.l.b16 %v94
    %v156 = vunpack.c.l.b16 %v95
    %v157 = vunpack.c.l.b16 %v96
    %v158 = vpack.c.b16 %v141, %v140
    %v159 = vpack.c.b16 %v143, %v142
    %v160 = vpack.c.b16 %v145, %v144
    %v161 = vpack.c.b16 %v147, %v146
    %v162 = vpack.c.b16 %v149, %v148
    %v163 = vpack.c.b16 %v151, %v150
    %v164 = vpack.c.b16 %v153, %v152
    %v165 = vpack.c.b16 %v155, %v154
    %v166 = vpack.c.b16 %v157, %v156
    %vm167 = vcmask 392192
    %v169 = vsel %vm167, %v158, 0
    %v172 = vsel %vm167, %v159, 0
    %v175 = vsel %vm167, %v160, 0
    %v178 = vsel %vm167, %v161, 0
    %v181 = vsel %vm167, %v162, 0
    %v184 = vsel %vm167, %v163, 0
    %v187 = vsel %vm167, %v164, 0
    %v190 = vsel %vm167, %v165, 0
    %v193 = vsel %vm167, %v166, 0
    %195 = vmatpush.bf16.msra.mxu0 0
    %196 = vmatpush.bf16.msra.mxu0 0
    %197 = vmatpush.bf16.msra.mxu0 0
    %198 = vmatpush.bf16.msra.mxu0 0
    %199 = vmatpush.bf16.msra.mxu0 0
    %200 = vmatpush.bf16.msra.mxu0 %v121
    %201 = vmatpush.bf16.msra.mxu0 %v120
    %202 = vmatpush.bf16.msra.mxu0 %v119
    %203 = vmatmul.bf16.gmra.mxu0 %v169
    %v204 = vpop.f32.mrf.mxu0
    %v205 = vadd.f32 0.0, %v204
    %v206 = vpop.f32.mrf.mxu0
    %v207 = vadd.f32 0.0, %v206
    %208 = vmatmul.bf16.gmra.mxu0 %v172
    %v209 = vpop.f32.mrf.mxu0
    %v210 = vadd.f32 0.0, %v209
    %v211 = vpop.f32.mrf.mxu0
    %v212 = vadd.f32 0.0, %v211
    %213 = vmatmul.bf16.gmra.mxu0 %v175
    %v214 = vpop.f32.mrf.mxu0
    %v215 = vadd.f32 0.0, %v214
    %v216 = vpop.f32.mrf.mxu0
    %v217 = vadd.f32 0.0, %v216
    %218 = vmatmul.bf16.gmra.mxu0 %v178
    %v219 = vpop.f32.mrf.mxu0
    %v220 = vadd.f32 0.0, %v219
    %v221 = vpop.f32.mrf.mxu0
    %v222 = vadd.f32 0.0, %v221
    %223 = vmatmul.bf16.gmra.mxu0 %v181
    %v224 = vpop.f32.mrf.mxu0
    %v225 = vadd.f32 0.0, %v224
    %v226 = vpop.f32.mrf.mxu0
    %v227 = vadd.f32 0.0, %v226
    %228 = vmatmul.bf16.gmra.mxu0 %v184
    %v229 = vpop.f32.mrf.mxu0
    %v230 = vadd.f32 0.0, %v229
    %v231 = vpop.f32.mrf.mxu0
    %v232 = vadd.f32 0.0, %v231
    %233 = vmatmul.bf16.gmra.mxu0 %v187
    %v234 = vpop.f32.mrf.mxu0
    %v235 = vadd.f32 0.0, %v234
    %v236 = vpop.f32.mrf.mxu0
    %v237 = vadd.f32 0.0, %v236
    %238 = vmatmul.bf16.gmra.mxu0 %v190
    %v239 = vpop.f32.mrf.mxu0
    %v240 = vadd.f32 0.0, %v239
    %v241 = vpop.f32.mrf.mxu0
    %v242 = vadd.f32 0.0, %v241
    %243 = vmatmul.bf16.gmra.mxu0 %v193
    %v244 = vpop.f32.mrf.mxu0
    %v245 = vadd.f32 0.0, %v244
    %v246 = vpop.f32.mrf.mxu0
    %v247 = vadd.f32 0.0, %v246
    %248 = vdwg.mxu0
    %v249 = vpack.c.bf16 %v207, %v205
    %v250 = vpack.c.bf16 %v212, %v210
    %v251 = vpack.c.bf16 %v217, %v215
    %v252 = vpack.c.bf16 %v222, %v220
    %v253 = vpack.c.bf16 %v227, %v225
    %v254 = vpack.c.bf16 %v232, %v230
    %v259 = vunpack.c.l.b16 %v101
    %v260 = vunpack.c.l.b16 %v102
    %v261 = vunpack.c.l.b16 %v103
    %v262 = vunpack.c.l.b16 %v104
    %v263 = vpack.c.b16 %v260, %v259
    %v264 = vpack.c.b16 %v262, %v261
    %vm267 = vcmask 261120
    %v269 = vsel %vm267, %v252, 0
    %v272 = vsel %vm267, %v253, 0
    %v275 = vsel %vm267, %v254, 0
    %277 = vmatpush.bf16.msra.mxu0 0
    %278 = vmatpush.bf16.msra.mxu0 0
    %279 = vmatpush.bf16.msra.mxu0 0
    %280 = vmatpush.bf16.msra.mxu0 0
    %281 = vmatpush.bf16.msra.mxu0 0
    %282 = vmatpush.bf16.msra.mxu0 0
    %283 = vmatpush.bf16.msra.mxu0 %v264
    %284 = vmatpush.bf16.msra.mxu0 %v263
    %285 = vmatmul.bf16.gmra.mxu0 %v269
    %v286 = vpop.f32.mrf.mxu0
    %v287 = vadd.f32 0.0, %v286
    %v288 = vpop.f32.mrf.mxu0
    %v289 = vadd.f32 0.0, %v288
    %290 = vmatmul.bf16.gmra.mxu0 %v272
    %v291 = vpop.f32.mrf.mxu0
    %v292 = vadd.f32 0.0, %v291
    %v293 = vpop.f32.mrf.mxu0
    %v294 = vadd.f32 0.0, %v293
    %295 = vmatmul.bf16.gmra.mxu0 %v275
    %v296 = vpop.f32.mrf.mxu0
    %v297 = vadd.f32 0.0, %v296
    %v298 = vpop.f32.mrf.mxu0
    %v299 = vadd.f32 0.0, %v298
    %300 = vdwg.mxu0
    %v305 = vunpack.c.l.b16 %v97
    %v306 = vunpack.c.l.b16 %v98
    %v307 = vunpack.c.l.b16 %v99
    %v308 = vunpack.c.l.b16 %v100
    %v309 = vpack.c.b16 %v306, %v305
    %v310 = vpack.c.b16 %v308, %v307
    %v314 = vsel %vm267, %v249, 0
    %v317 = vsel %vm267, %v250, 0
    %v320 = vsel %vm267, %v251, 0
    %322 = vmatpush.bf16.msra.mxu0 0
    %323 = vmatpush.bf16.msra.mxu0 0
    %324 = vmatpush.bf16.msra.mxu0 0
    %325 = vmatpush.bf16.msra.mxu0 0
    %326 = vmatpush.bf16.msra.mxu0 0
    %327 = vmatpush.bf16.msra.mxu0 0
    %328 = vmatpush.bf16.msra.mxu0 %v310
    %329 = vmatpush.bf16.msra.mxu0 %v309
    %330 = vmatmul.bf16.gmra.mxu0 %v314
    %v331 = vpop.f32.mrf.mxu0
    %v332 = vadd.f32 %v287, %v331
    %v333 = vpop.f32.mrf.mxu0
    %v334 = vadd.f32 %v289, %v333
    %335 = vmatmul.bf16.gmra.mxu0 %v317
    %v336 = vpop.f32.mrf.mxu0
    %v337 = vadd.f32 %v292, %v336
    %v338 = vpop.f32.mrf.mxu0
    %v339 = vadd.f32 %v294, %v338
    %340 = vmatmul.bf16.gmra.mxu0 %v320
    %v341 = vpop.f32.mrf.mxu0
    %v342 = vadd.f32 %v297, %v341
    %v343 = vpop.f32.mrf.mxu0
    %v344 = vadd.f32 %v299, %v343
    %345 = vdwg.mxu0
    %v346 = vpack.c.bf16 %v237, %v235
    %v347 = vpack.c.bf16 %v242, %v240
    %v348 = vpack.c.bf16 %v247, %v245
    %v353 = vunpack.c.l.b16 %v105
    %v354 = vunpack.c.l.b16 %v106
    %v355 = vunpack.c.l.b16 %v107
    %v356 = vunpack.c.l.b16 %v108
    %v357 = vpack.c.b16 %v354, %v353
    %v358 = vpack.c.b16 %v356, %v355
    %v362 = vsel %vm267, %v346, 0
    %v365 = vsel %vm267, %v347, 0
    %v368 = vsel %vm267, %v348, 0
    %370 = vmatpush.bf16.msra.mxu0 0
    %371 = vmatpush.bf16.msra.mxu0 0
    %372 = vmatpush.bf16.msra.mxu0 0
    %373 = vmatpush.bf16.msra.mxu0 0
    %374 = vmatpush.bf16.msra.mxu0 0
    %375 = vmatpush.bf16.msra.mxu0 0
    %376 = vmatpush.bf16.msra.mxu0 %v358
    %377 = vmatpush.bf16.msra.mxu0 %v357
    %378 = vmatmul.bf16.gmra.mxu0 %v362
    %v379 = vpop.f32.mrf.mxu0
    %v380 = vadd.f32 0.0, %v379
    %v381 = vpop.f32.mrf.mxu0
    %v382 = vadd.f32 0.0, %v381
    %383 = vmatmul.bf16.gmra.mxu0 %v365
    %v384 = vpop.f32.mrf.mxu0
    %v385 = vadd.f32 0.0, %v384
    %v386 = vpop.f32.mrf.mxu0
    %v387 = vadd.f32 0.0, %v386
    %388 = vmatmul.bf16.gmra.mxu0 %v368
    %v389 = vpop.f32.mrf.mxu0
    %v390 = vadd.f32 0.0, %v389
    %v391 = vpop.f32.mrf.mxu0
    %v392 = vadd.f32 0.0, %v391
    %393 = vdwg.mxu0
    %v394 = vadd.f32 %v332, %v380
    %v395 = vadd.f32 %v334, %v382
    %v396 = vadd.f32 %v337, %v385
    %v397 = vadd.f32 %v339, %v387
    %v398 = vadd.f32 %v342, %v390
    %v399 = vadd.f32 %v344, %v392
    %v401 = vperm.slane %v117, 0
    %v403 = vadd.f32 %v394, %v401
    %v404 = vadd.f32 %v395, %v401
    %v405 = vadd.f32 %v396, %v401
    %v406 = vadd.f32 %v397, %v401
    %v407 = vadd.f32 %v398, %v401
    %v408 = vadd.f32 %v399, %v401
    %v409 = vpack.c.bf16 %v404, %v403
    %v410 = vpack.c.bf16 %v406, %v405
    %v411 = vpack.c.bf16 %v408, %v407
    %v413 = vperm.slane %v118, 0
    %v423 = vunpack.c.l.b16 %v109
    %v424 = vunpack.c.l.b16 %v110
    %v425 = vunpack.c.l.b16 %v111
    %v426 = vunpack.c.l.b16 %v112
    %v427 = vunpack.c.l.b16 %v113
    %v428 = vunpack.c.l.b16 %v114
    %v429 = vunpack.c.l.b16 %v115
    %v430 = vunpack.c.l.b16 %v116
    %v431 = vpack.c.b16 %v424, %v423
    %v432 = vpack.c.b16 %v426, %v425
    %v433 = vpack.c.b16 %v428, %v427
    %v434 = vpack.c.b16 %v430, %v429
    %vm439 = vcmask 523264
    %v441 = vsel %vm439, %v409, 0
    %v444 = vsel %vm439, %v410, 0
    %v447 = vsel %vm439, %v411, 0
    %449 = vmatpush.bf16.msra.mxu0 0
    %450 = vmatpush.bf16.msra.mxu0 0
    %451 = vmatpush.bf16.msra.mxu0 0
    %452 = vmatpush.bf16.msra.mxu0 0
    %453 = vmatpush.bf16.msra.mxu0 %v434
    %454 = vmatpush.bf16.msra.mxu0 %v433
    %455 = vmatpush.bf16.msra.mxu0 %v432
    %456 = vmatpush.bf16.msra.mxu0 %v431
    %457 = vmatmul.bf16.gmra.mxu0 %v441
    %v458 = vpop.f32.mrf.mxu0
    %v459 = vadd.f32 %v413, %v458
    %v460 = vpop.f32.mrf.mxu0
    %v461 = vadd.f32 %v413, %v460
    %462 = vmatmul.bf16.gmra.mxu0 %v444
    %v463 = vpop.f32.mrf.mxu0
    %v464 = vadd.f32 %v413, %v463
    %v465 = vpop.f32.mrf.mxu0
    %v466 = vadd.f32 %v413, %v465
    %467 = vmatmul.bf16.gmra.mxu0 %v447
    %v468 = vpop.f32.mrf.mxu0
    %v469 = vadd.f32 %v413, %v468
    %v470 = vpop.f32.mrf.mxu0
    %v471 = vadd.f32 %v413, %v470
    %472 = vdwg.mxu0
    %v473 = vsub.f32 0.0, %v459
    %v474 = vsub.f32 0.0, %v461
    %v475 = vsub.f32 0.0, %v464
    %v476 = vsub.f32 0.0, %v466
    %v477 = vsub.f32 0.0, %v469
    %v478 = vsub.f32 0.0, %v471
    %v479 = vmul.f32 %v473, 1.442695
    %v480 = vpow.pop %v479
    %v481 = vmul.f32 %v474, 1.442695
    %v482 = vpow.pop %v481
    %v483 = vmul.f32 %v475, 1.442695
    %v484 = vpow.pop %v483
    %v485 = vmul.f32 %v476, 1.442695
    %v486 = vpow.pop %v485
    %v487 = vmul.f32 %v477, 1.442695
    %v488 = vpow.pop %v487
    %v489 = vmul.f32 %v478, 1.442695
    %v490 = vpow.pop %v489
    %v491 = vadd.f32 %v480, 1.0
    %v492 = vadd.f32 %v482, 1.0
    %v493 = vadd.f32 %v484, 1.0
    %v494 = vadd.f32 %v486, 1.0
    %v495 = vadd.f32 %v488, 1.0
    %v496 = vadd.f32 %v490, 1.0
    %v497 = vrcp.pop %v491
    %v498 = vrcp.pop %v492
    %v499 = vrcp.pop %v493
    %v500 = vrcp.pop %v494
    %v501 = vrcp.pop %v495
    %v502 = vrcp.pop %v496
    %v503 = vmul.f32 %v403, %v497
    %v504 = vmul.f32 %v404, %v498
    %v505 = vmul.f32 %v405, %v499
    %v506 = vmul.f32 %v406, %v500
    %v507 = vmul.f32 %v407, %v501
    %v508 = vmul.f32 %v408, %v502
    %v509 = vmax.f32 %v503, 0.0
    %v510 = vmax.f32 %v504, 0.0
    %v511 = vmax.f32 %v505, 0.0
    %v512 = vmax.f32 %v506, 0.0
    %v513 = vmax.f32 %v507, 0.0
    %v514 = vmax.f32 %v508, 0.0
    %518 = vrot.lane.b32.xlu0 %v509, 96
    %v519 = vpop.permute.xlu0 %518
    %520 = vrot.lane.b32.xlu0 %v510, 96
    %v521 = vpop.permute.xlu0 %520
    %522 = vrot.lane.b32.xlu0 %v511, 96
    %v523 = vpop.permute.xlu0 %522
    %v527 = vmax.f32 %v509, %v519
    %v528 = vmax.f32 %v510, %v521
    %v529 = vmax.f32 %v511, %v523
    %533 = vrot.lane.b32.xlu0 %v512, 96
    %v534 = vpop.permute.xlu0 %533
    %535 = vrot.lane.b32.xlu0 %v513, 96
    %v536 = vpop.permute.xlu0 %535
    %537 = vrot.lane.b32.xlu0 %v514, 96
    %v538 = vpop.permute.xlu0 %537
    %v542 = vmax.f32 %v512, %v534
    %v543 = vmax.f32 %v513, %v536
    %v544 = vmax.f32 %v514, %v538
    %v545 = vmax.f32 %v527, %v542
    %v546 = vmax.f32 %v528, %v543
    %v547 = vmax.f32 %v529, %v544
    %v548 = vld [vmem:[%s6] sm:$0xf]
    %v549 = vld [vmem:[%s6 + $0x4] sm:$0xf]
    %v550 = vld [vmem:[%s6 + $0x8] sm:$0xf]
    %v551 = vld [vmem:[%s6 + $0xc] sm:$0xf]
    %v552 = vld [vmem:[%s6 + $0x10] sm:$0xf]
    %v553 = vld [vmem:[%s6 + $0x14] sm:$0xf]
    %v554 = vld [vmem:[%s6 + $0x18] sm:$0xf]
    %v555 = vld [vmem:[%s6 + $0x1c] sm:$0xf]
    %v556 = vld [vmem:[%s6 + $0x20] sm:$0xf]
    %v557 = vld [vmem:[%s7] sm:$0xf]
    %v558 = vld [vmem:[%s7 + $0x4] sm:$0xf]
    %v559 = vld [vmem:[%s7 + $0x8] sm:$0xf]
    %v560 = vld [vmem:[%s7 + $0xc] sm:$0xf]
    %v561 = vld [vmem:[%s7 + $0x10] sm:$0xf]
    %v562 = vld [vmem:[%s7 + $0x14] sm:$0xf]
    %v563 = vld [vmem:[%s7 + $0x18] sm:$0xf]
    %v564 = vld [vmem:[%s7 + $0x1c] sm:$0xf]
    %v565 = vld [vmem:[%s7 + $0x20] sm:$0xf]
    %v566 = vld [vmem:[%s7 + $0x24] sm:$0xf]
    %v567 = vld [vmem:[%s7 + $0x28] sm:$0xf]
    %v568 = vld [vmem:[%s7 + $0x2c] sm:$0xf]
    %v569 = vld [vmem:[%s8] sm:$0xf]
    %v570 = vld [vmem:[%s8 + $0x4] sm:$0xf]
    %v571 = vld [vmem:[%s8 + $0x8] sm:$0xf]
    %v572 = vld [vmem:[%s8 + $0xc] sm:$0xf]
    %v573 = vld [vmem:[%s8 + $0x10] sm:$0xf]
    %v574 = vld [vmem:[%s8 + $0x14] sm:$0xf]
    %v575 = vld [vmem:[%s8 + $0x18] sm:$0xf]
    %v576 = vld [vmem:[%s8 + $0x1c] sm:$0xf]
    %v577 = vld [vmem:[%s9] sm:$0x1]
    %v578 = vld [vmem:[%s10] sm:$0x1]
    %v579 = vpack.c.bf16 %v546, %v545
    %v580 = vpack.c.bf16 %v547, %v547
    %v590 = vunpack.c.l.b16 %v548
    %v591 = vunpack.c.l.b16 %v549
    %v592 = vunpack.c.l.b16 %v550
    %v593 = vunpack.c.l.b16 %v551
    %v594 = vunpack.c.l.b16 %v552
    %v595 = vunpack.c.l.b16 %v553
    %v596 = vunpack.c.l.b16 %v554
    %v597 = vunpack.c.l.b16 %v555
    %v598 = vunpack.c.l.b16 %v556
    %v599 = vpack.c.b16 %v591, %v590
    %v600 = vpack.c.b16 %v593, %v592
    %v601 = vpack.c.b16 %v595, %v594
    %v602 = vpack.c.b16 %v597, %v596
    %v603 = vpack.c.b16 %v598, %v598
    %vm604 = vcmask 195584
    %v606 = vsel %vm604, %v599, 0
    %v609 = vsel %vm604, %v600, 0
    %v612 = vsel %vm604, %v601, 0
    %v615 = vsel %vm604, %v602, 0
    %v618 = vsel %vm604, %v603, 0
    %vm620 = vcmask 1043456
    %v622 = vsel %vm620, %v580, 0
    %624 = vmatpush.bf16.msra.mxu0 0
    %625 = vmatpush.bf16.msra.mxu0 0
    %626 = vmatpush.bf16.msra.mxu0 0
    %627 = vmatpush.bf16.msra.mxu0 0
    %628 = vmatpush.bf16.msra.mxu0 0
    %629 = vmatpush.bf16.msra.mxu0 0
    %630 = vmatpush.bf16.msra.mxu0 %v622
    %631 = vmatpush.bf16.msra.mxu0 %v579
    %632 = vmatmul.bf16.gmra.mxu0 %v606
    %v633 = vpop.f32.mrf.mxu0
    %v634 = vadd.f32 0.0, %v633
    %v635 = vpop.f32.mrf.mxu0
    %v636 = vadd.f32 0.0, %v635
    %637 = vmatmul.bf16.gmra.mxu0 %v609
    %v638 = vpop.f32.mrf.mxu0
    %v639 = vadd.f32 0.0, %v638
    %v640 = vpop.f32.mrf.mxu0
    %v641 = vadd.f32 0.0, %v640
    %642 = vmatmul.bf16.gmra.mxu0 %v612
    %v643 = vpop.f32.mrf.mxu0
    %v644 = vadd.f32 0.0, %v643
    %v645 = vpop.f32.mrf.mxu0
    %v646 = vadd.f32 0.0, %v645
    %647 = vmatmul.bf16.gmra.mxu0 %v615
    %v648 = vpop.f32.mrf.mxu0
    %v649 = vadd.f32 0.0, %v648
    %v650 = vpop.f32.mrf.mxu0
    %v651 = vadd.f32 0.0, %v650
    %652 = vmatmul.bf16.gmra.mxu0 %v618
    %v653 = vpop.f32.mrf.mxu0
    %v654 = vadd.f32 0.0, %v653
    %v655 = vpop.f32.mrf.mxu0
    %656 = vdwg.mxu0
    %v657 = vpack.c.bf16 %v636, %v634
    %v658 = vpack.c.bf16 %v639, %v639
    %v659 = vpack.c.bf16 %v644, %v641
    %v660 = vpack.c.bf16 %v646, %v646
    %v665 = vunpack.c.l.b16 %v561
    %v666 = vunpack.c.l.b16 %v562
    %v667 = vunpack.c.l.b16 %v563
    %v668 = vunpack.c.l.b16 %v564
    %v669 = vpack.c.b16 %v666, %v665
    %v670 = vpack.c.b16 %v668, %v667
    %v674 = vsel %vm267, %v659, 0
    %v677 = vsel %vm267, %v660, 0
    %679 = vmatpush.bf16.msra.mxu0 0
    %680 = vmatpush.bf16.msra.mxu0 0
    %681 = vmatpush.bf16.msra.mxu0 0
    %682 = vmatpush.bf16.msra.mxu0 0
    %683 = vmatpush.bf16.msra.mxu0 0
    %684 = vmatpush.bf16.msra.mxu0 0
    %685 = vmatpush.bf16.msra.mxu0 %v670
    %686 = vmatpush.bf16.msra.mxu0 %v669
    %687 = vmatmul.bf16.gmra.mxu0 %v674
    %v688 = vpop.f32.mrf.mxu0
    %v689 = vadd.f32 0.0, %v688
    %v690 = vpop.f32.mrf.mxu0
    %v691 = vadd.f32 0.0, %v690
    %692 = vmatmul.bf16.gmra.mxu0 %v677
    %v693 = vpop.f32.mrf.mxu0
    %v694 = vadd.f32 0.0, %v693
    %v695 = vpop.f32.mrf.mxu0
    %696 = vdwg.mxu0
    %v701 = vunpack.c.l.b16 %v557
    %v702 = vunpack.c.l.b16 %v558
    %v703 = vunpack.c.l.b16 %v559
    %v704 = vunpack.c.l.b16 %v560
    %v705 = vpack.c.b16 %v702, %v701
    %v706 = vpack.c.b16 %v704, %v703
    %v710 = vsel %vm267, %v657, 0
    %v713 = vsel %vm267, %v658, 0
    %715 = vmatpush.bf16.msra.mxu0 0
    %716 = vmatpush.bf16.msra.mxu0 0
    %717 = vmatpush.bf16.msra.mxu0 0
    %718 = vmatpush.bf16.msra.mxu0 0
    %719 = vmatpush.bf16.msra.mxu0 0
    %720 = vmatpush.bf16.msra.mxu0 0
    %721 = vmatpush.bf16.msra.mxu0 %v706
    %722 = vmatpush.bf16.msra.mxu0 %v705
    %723 = vmatmul.bf16.gmra.mxu0 %v710
    %v724 = vpop.f32.mrf.mxu0
    %v725 = vadd.f32 %v689, %v724
    %v726 = vpop.f32.mrf.mxu0
    %v727 = vadd.f32 %v691, %v726
    %728 = vmatmul.bf16.gmra.mxu0 %v713
    %v729 = vpop.f32.mrf.mxu0
    %v730 = vadd.f32 %v694, %v729
    %v731 = vpop.f32.mrf.mxu0
    %732 = vdwg.mxu0
    %v733 = vpack.c.bf16 %v651, %v649
    %v734 = vpack.c.bf16 %v654, %v654
    %v739 = vunpack.c.l.b16 %v565
    %v740 = vunpack.c.l.b16 %v566
    %v741 = vunpack.c.l.b16 %v567
    %v742 = vunpack.c.l.b16 %v568
    %v743 = vpack.c.b16 %v740, %v739
    %v744 = vpack.c.b16 %v742, %v741
    %v748 = vsel %vm267, %v733, 0
    %v751 = vsel %vm267, %v734, 0
    %753 = vmatpush.bf16.msra.mxu0 0
    %754 = vmatpush.bf16.msra.mxu0 0
    %755 = vmatpush.bf16.msra.mxu0 0
    %756 = vmatpush.bf16.msra.mxu0 0
    %757 = vmatpush.bf16.msra.mxu0 0
    %758 = vmatpush.bf16.msra.mxu0 0
    %759 = vmatpush.bf16.msra.mxu0 %v744
    %760 = vmatpush.bf16.msra.mxu0 %v743
    %761 = vmatmul.bf16.gmra.mxu0 %v748
    %v762 = vpop.f32.mrf.mxu0
    %v763 = vadd.f32 0.0, %v762
    %v764 = vpop.f32.mrf.mxu0
    %v765 = vadd.f32 0.0, %v764
    %766 = vmatmul.bf16.gmra.mxu0 %v751
    %v767 = vpop.f32.mrf.mxu0
    %v768 = vadd.f32 0.0, %v767
    %v769 = vpop.f32.mrf.mxu0
    %770 = vdwg.mxu0
    %v771 = vadd.f32 %v725, %v763
    %v772 = vadd.f32 %v727, %v765
    %v773 = vadd.f32 %v730, %v768
    %v775 = vperm.slane %v577, 0
    %v777 = vadd.f32 %v771, %v775
    %v778 = vadd.f32 %v772, %v775
    %v779 = vadd.f32 %v773, %v775
    %v780 = vpack.c.bf16 %v778, %v777
    %v781 = vpack.c.bf16 %v779, %v779
    %v783 = vperm.slane %v578, 0
    %v793 = vunpack.c.l.b16 %v569
    %v794 = vunpack.c.l.b16 %v570
    %v795 = vunpack.c.l.b16 %v571
    %v796 = vunpack.c.l.b16 %v572
    %v797 = vunpack.c.l.b16 %v573
    %v798 = vunpack.c.l.b16 %v574
    %v799 = vunpack.c.l.b16 %v575
    %v800 = vunpack.c.l.b16 %v576
    %v801 = vpack.c.b16 %v794, %v793
    %v802 = vpack.c.b16 %v796, %v795
    %v803 = vpack.c.b16 %v798, %v797
    %v804 = vpack.c.b16 %v800, %v799
    %v810 = vsel %vm439, %v780, 0
    %v813 = vsel %vm439, %v781, 0
    %815 = vmatpush.bf16.msra.mxu0 0
    %816 = vmatpush.bf16.msra.mxu0 0
    %817 = vmatpush.bf16.msra.mxu0 0
    %818 = vmatpush.bf16.msra.mxu0 0
    %819 = vmatpush.bf16.msra.mxu0 %v804
    %820 = vmatpush.bf16.msra.mxu0 %v803
    %821 = vmatpush.bf16.msra.mxu0 %v802
    %822 = vmatpush.bf16.msra.mxu0 %v801
    %823 = vmatmul.bf16.gmra.mxu0 %v810
    %v824 = vpop.f32.mrf.mxu0
    %v825 = vadd.f32 %v783, %v824
    %v826 = vpop.f32.mrf.mxu0
    %v827 = vadd.f32 %v783, %v826
    %828 = vmatmul.bf16.gmra.mxu0 %v813
    %v829 = vpop.f32.mrf.mxu0
    %v830 = vadd.f32 %v783, %v829
    %v831 = vpop.f32.mrf.mxu0
    %832 = vdwg.mxu0
    %v833 = vsub.f32 0.0, %v825
    %v834 = vsub.f32 0.0, %v827
    %v835 = vsub.f32 0.0, %v830
    %v836 = vmul.f32 %v833, 1.442695
    %v837 = vpow.pop %v836
    %v838 = vmul.f32 %v834, 1.442695
    %v839 = vpow.pop %v838
    %v840 = vmul.f32 %v835, 1.442695
    %v841 = vpow.pop %v840
    %v842 = vadd.f32 %v837, 1.0
    %v843 = vadd.f32 %v839, 1.0
    %v844 = vadd.f32 %v841, 1.0
    %v845 = vrcp.pop %v842
    %v846 = vrcp.pop %v843
    %v847 = vrcp.pop %v844
    %v848 = vmul.f32 %v777, %v845
    %v849 = vmul.f32 %v778, %v846
    %v850 = vmul.f32 %v779, %v847
    %v851 = vmax.f32 %v848, 0.0
    %v852 = vmax.f32 %v849, 0.0
    %v853 = vmax.f32 %v850, 0.0
    %856 = vrot.lane.b32.xlu0 %v851, 96
    %v857 = vpop.permute.xlu0 %856
    %858 = vrot.lane.b32.xlu0 %v852, 96
    %v859 = vpop.permute.xlu0 %858
    %v862 = vmax.f32 %v851, %v857
    %v863 = vmax.f32 %v852, %v859
    %865 = vrot.lane.b32.xlu0 %v853, 96
    %v866 = vpop.permute.xlu0 %865
    %v868 = vmax.f32 %v853, %v866
    %v871 = vrot.slane %v863, 4
    %v872 = vrot.slane %v868, 4
    %v873 = vsel %vm620, %v871, %v872
    %v876 = vmax.f32 %v862, %v873
    %v877 = vmax.f32 %v863, %v872
    %v878 = vld [vmem:[%s11] sm:$0xf]
    %v879 = vld [vmem:[%s11 + $0x4] sm:$0xf]
    %v880 = vld [vmem:[%s11 + $0x8] sm:$0xf]
    %v881 = vld [vmem:[%s11 + $0xc] sm:$0xf]
    %v882 = vld [vmem:[%s11 + $0x10] sm:$0x3]
    %v883 = vld [vmem:[%s12] sm:$0xf]
    %v884 = vld [vmem:[%s12 + $0x4] sm:$0xf]
    %v885 = vld [vmem:[%s12 + $0x8] sm:$0xf]
    %v886 = vld [vmem:[%s12 + $0xc] sm:$0xf]
    %v887 = vld [vmem:[%s12 + $0x10] sm:$0xf]
    %v888 = vld [vmem:[%s12 + $0x14] sm:$0xf]
    %v889 = vld [vmem:[%s12 + $0x18] sm:$0xf]
    %v890 = vld [vmem:[%s12 + $0x1c] sm:$0xf]
    %v891 = vld [vmem:[%s12 + $0x20] sm:$0xf]
    %v892 = vld [vmem:[%s12 + $0x24] sm:$0xf]
    %v893 = vld [vmem:[%s12 + $0x28] sm:$0xf]
    %v894 = vld [vmem:[%s12 + $0x2c] sm:$0xf]
    %v895 = vld [vmem:[%s13] sm:$0xf]
    %v896 = vld [vmem:[%s13 + $0x4] sm:$0xf]
    %v897 = vld [vmem:[%s13 + $0x8] sm:$0xf]
    %v898 = vld [vmem:[%s13 + $0xc] sm:$0xf]
    %v899 = vld [vmem:[%s13 + $0x10] sm:$0xf]
    %v900 = vld [vmem:[%s13 + $0x14] sm:$0xf]
    %v901 = vld [vmem:[%s14] sm:$0x1]
    %v902 = vld [vmem:[%s15] sm:$0x1]
    %v903 = vpack.c.bf16 %v877, %v876
    %v909 = vunpack.c.l.b16 %v878
    %v910 = vunpack.c.l.b16 %v879
    %v911 = vunpack.c.l.b16 %v880
    %v912 = vunpack.c.l.b16 %v881
    %v913 = vunpack.c.l.b16 %v882
    %v914 = vpack.c.b16 %v910, %v909
    %v915 = vpack.c.b16 %v912, %v911
    %v916 = vpack.c.b16 %v913, %v913
    %vm917 = vcmask 97280
    %v919 = vsel %vm917, %v914, 0
    %v922 = vsel %vm917, %v915, 0
    %v925 = vsel %vm917, %v916, 0
    %vm927 = vcmask 1045504
    %v929 = vsel %vm927, %v903, 0
    %931 = vmatpush.bf16.msra.mxu0 0
    %932 = vmatpush.bf16.msra.mxu0 0
    %933 = vmatpush.bf16.msra.mxu0 0
    %934 = vmatpush.bf16.msra.mxu0 0
    %935 = vmatpush.bf16.msra.mxu0 0
    %936 = vmatpush.bf16.msra.mxu0 0
    %937 = vmatpush.bf16.msra.mxu0 0
    %938 = vmatpush.bf16.msra.mxu0 %v929
    %939 = vmatmul.bf16.gmra.mxu0 %v919
    %v940 = vpop.f32.mrf.mxu0
    %v941 = vadd.f32 0.0, %v940
    %v942 = vpop.f32.mrf.mxu0
    %v943 = vadd.f32 0.0, %v942
    %944 = vmatmul.bf16.gmra.mxu0 %v922
    %v945 = vpop.f32.mrf.mxu0
    %v946 = vadd.f32 0.0, %v945
    %v947 = vpop.f32.mrf.mxu0
    %v948 = vadd.f32 0.0, %v947
    %949 = vmatmul.bf16.gmra.mxu0 %v925
    %v950 = vpop.f32.mrf.mxu0
    %v951 = vadd.f32 0.0, %v950
    %v952 = vpop.f32.mrf.mxu0
    %953 = vdwg.mxu0
    %v954 = vpack.c.bf16 %v943, %v941
    %v955 = vpack.c.bf16 %v946, %v943
    %v957 = vrot.slane %v955, 2
    %v962 = vunpack.c.l.b16 %v887
    %v963 = vunpack.c.l.b16 %v888
    %v964 = vunpack.c.l.b16 %v889
    %v965 = vunpack.c.l.b16 %v890
    %v966 = vpack.c.b16 %v963, %v962
    %v967 = vpack.c.b16 %v965, %v964
    %v971 = vsel %vm267, %v957, 0
    %973 = vmatpush.bf16.msra.mxu0 0
    %974 = vmatpush.bf16.msra.mxu0 0
    %975 = vmatpush.bf16.msra.mxu0 0
    %976 = vmatpush.bf16.msra.mxu0 0
    %977 = vmatpush.bf16.msra.mxu0 0
    %978 = vmatpush.bf16.msra.mxu0 0
    %979 = vmatpush.bf16.msra.mxu0 %v967
    %980 = vmatpush.bf16.msra.mxu0 %v966
    %981 = vmatmul.bf16.gmra.mxu0 %v971
    %v982 = vpop.f32.mrf.mxu0
    %v983 = vadd.f32 0.0, %v982
    %v984 = vpop.f32.mrf.mxu0
    %v985 = vadd.f32 0.0, %v984
    %986 = vdwg.mxu0
    %v991 = vunpack.c.l.b16 %v883
    %v992 = vunpack.c.l.b16 %v884
    %v993 = vunpack.c.l.b16 %v885
    %v994 = vunpack.c.l.b16 %v886
    %v995 = vpack.c.b16 %v992, %v991
    %v996 = vpack.c.b16 %v994, %v993
    %v1000 = vsel %vm267, %v954, 0
    %1002 = vmatpush.bf16.msra.mxu0 0
    %1003 = vmatpush.bf16.msra.mxu0 0
    %1004 = vmatpush.bf16.msra.mxu0 0
    %1005 = vmatpush.bf16.msra.mxu0 0
    %1006 = vmatpush.bf16.msra.mxu0 0
    %1007 = vmatpush.bf16.msra.mxu0 0
    %1008 = vmatpush.bf16.msra.mxu0 %v996
    %1009 = vmatpush.bf16.msra.mxu0 %v995
    %1010 = vmatmul.bf16.gmra.mxu0 %v1000
    %v1011 = vpop.f32.mrf.mxu0
    %v1012 = vadd.f32 %v983, %v1011
    %v1013 = vpop.f32.mrf.mxu0
    %v1014 = vadd.f32 %v985, %v1013
    %1015 = vdwg.mxu0
    %v1016 = vpack.c.bf16 %v951, %v948
    %v1021 = vunpack.c.l.b16 %v891
    %v1022 = vunpack.c.l.b16 %v892
    %v1023 = vunpack.c.l.b16 %v893
    %v1024 = vunpack.c.l.b16 %v894
    %v1025 = vpack.c.b16 %v1022, %v1021
    %v1026 = vpack.c.b16 %v1024, %v1023
    %v1030 = vsel %vm267, %v1016, 0
    %1032 = vmatpush.bf16.msra.mxu0 0
    %1033 = vmatpush.bf16.msra.mxu0 0
    %1034 = vmatpush.bf16.msra.mxu0 0
    %1035 = vmatpush.bf16.msra.mxu0 0
    %1036 = vmatpush.bf16.msra.mxu0 0
    %1037 = vmatpush.bf16.msra.mxu0 0
    %1038 = vmatpush.bf16.msra.mxu0 %v1026
    %1039 = vmatpush.bf16.msra.mxu0 %v1025
    %1040 = vmatmul.bf16.gmra.mxu0 %v1030
    %v1041 = vpop.f32.mrf.mxu0
    %v1042 = vadd.f32 0.0, %v1041
    %v1043 = vpop.f32.mrf.mxu0
    %v1044 = vadd.f32 0.0, %v1043
    %1045 = vdwg.mxu0
    %v1046 = vadd.f32 %v1012, %v1042
    %v1047 = vadd.f32 %v1014, %v1044
    %v1049 = vperm.slane %v901, 0
    %v1051 = vadd.f32 %v1046, %v1049
    %v1052 = vadd.f32 %v1047, %v1049
    %v1053 = vpack.c.bf16 %v1052, %v1051
    %v1055 = vperm.slane %v902, 0
    %v1063 = vunpack.c.l.b16 %v895
    %v1064 = vunpack.c.l.b16 %v896
    %v1065 = vunpack.c.l.b16 %v897
    %v1066 = vunpack.c.l.b16 %v898
    %v1067 = vunpack.c.l.b16 %v899
    %v1068 = vunpack.c.l.b16 %v900
    %v1069 = vpack.c.b16 %v1064, %v1063
    %v1070 = vpack.c.b16 %v1066, %v1065
    %v1071 = vpack.c.b16 %v1068, %v1067
    %v1076 = vsel %vm167, %v1053, 0
    %1078 = vmatpush.bf16.msra.mxu0 0
    %1079 = vmatpush.bf16.msra.mxu0 0
    %1080 = vmatpush.bf16.msra.mxu0 0
    %1081 = vmatpush.bf16.msra.mxu0 0
    %1082 = vmatpush.bf16.msra.mxu0 0
    %1083 = vmatpush.bf16.msra.mxu0 %v1071
    %1084 = vmatpush.bf16.msra.mxu0 %v1070
    %1085 = vmatpush.bf16.msra.mxu0 %v1069
    %1086 = vmatmul.bf16.gmra.mxu0 %v1076
    %v1087 = vpop.f32.mrf.mxu0
    %v1088 = vadd.f32 %v1055, %v1087
    %v1089 = vpop.f32.mrf.mxu0
    %v1090 = vadd.f32 %v1055, %v1089
    %1091 = vdwg.mxu0
    %v1092 = vsub.f32 0.0, %v1088
    %v1093 = vsub.f32 0.0, %v1090
    %v1094 = vmul.f32 %v1092, 1.442695
    %v1095 = vpow.pop %v1094
    %v1096 = vmul.f32 %v1093, 1.442695
    %v1097 = vpow.pop %v1096
    %v1098 = vadd.f32 %v1095, 1.0
    %v1099 = vadd.f32 %v1097, 1.0
    %v1100 = vrcp.pop %v1098
    %v1101 = vrcp.pop %v1099
    %v1102 = vmul.f32 %v1051, %v1100
    %v1103 = vmul.f32 %v1052, %v1101
    %v1104 = vmax.f32 %v1102, 0.0
    %v1105 = vmax.f32 %v1103, 0.0
    %1107 = vrot.lane.b32.xlu0 %v1104, 104
    %v1108 = vpop.permute.xlu0 %1107
    %v1110 = vmax.f32 %v1104, %v1108
    %1112 = vrot.lane.b32.xlu0 %v1105, 104
    %v1113 = vpop.permute.xlu0 %1112
    %v1115 = vmax.f32 %v1105, %v1113
    %vm1118 = vcmask 1041408
    %v1119 = vrot.slane %v1110, 6
    %v1120 = vrot.slane %v1115, 6
    %v1121 = vsel %vm1118, %v1119, %v1120
    %v1123 = vmax.f32 %v1110, %v1121
    %v1124 = vld [vmem:[%s17] sm:$0x1]
    %v1125 = vld [vmem:[%s16] sm:$0xf]
    %v1126 = vld [vmem:[%s16 + $0x4] sm:$0xf]
    %v1127 = vld [vmem:[%s16 + $0x8] sm:$0xf]
    %v1128 = vpack.c.bf16 %v1123, %v1123
    %v1132 = vunpack.c.l.b16 %v1125
    %v1133 = vunpack.c.l.b16 %v1126
    %v1134 = vunpack.c.l.b16 %v1127
    %v1135 = vpack.c.b16 %v1133, %v1132
    %v1136 = vpack.c.b16 %v1134, %v1134
    %v1139 = vsel %vm604, %v1128, 0
    %v1142 = vsel %vm620, %v1136, 0
    %1144 = vmatpush.bf16.msra.mxu0 0
    %1145 = vmatpush.bf16.msra.mxu0 0
    %1146 = vmatpush.bf16.msra.mxu0 0
    %1147 = vmatpush.bf16.msra.mxu0 0
    %1148 = vmatpush.bf16.msra.mxu0 0
    %1149 = vmatpush.bf16.msra.mxu0 0
    %1150 = vmatpush.bf16.msra.mxu0 %v1142
    %1151 = vmatpush.bf16.msra.mxu0 %v1135
    %1152 = vmatmul.bf16.gmra.mxu0 %v1139
    %v1153 = vpop.f32.mrf.mxu0
    %v1154 = vadd.f32 0.0, %v1153
    %v1155 = vpop.f32.mrf.mxu0
    %1156 = vdwg.mxu0
    %v1158 = vperm.slane %v1124, 0
    %v1160 = vadd.f32 %v1158, %v1154
    %v1161 = vld [vmem:[%s16 + $0xc] sm:$0xf]
    %v1162 = vld [vmem:[%s16 + $0x10] sm:$0xf]
    %v1163 = vld [vmem:[%s16 + $0x14] sm:$0xf]
    %v1165 = vrot.slane %v1128, 1
    %v1169 = vunpack.c.l.b16 %v1161
    %v1170 = vunpack.c.l.b16 %v1162
    %v1171 = vunpack.c.l.b16 %v1163
    %v1172 = vpack.c.b16 %v1170, %v1169
    %v1173 = vpack.c.b16 %v1171, %v1171
    %v1176 = vsel %vm604, %v1165, 0
    %v1179 = vsel %vm620, %v1173, 0
    %1181 = vmatpush.bf16.msra.mxu0 0
    %1182 = vmatpush.bf16.msra.mxu0 0
    %1183 = vmatpush.bf16.msra.mxu0 0
    %1184 = vmatpush.bf16.msra.mxu0 0
    %1185 = vmatpush.bf16.msra.mxu0 0
    %1186 = vmatpush.bf16.msra.mxu0 0
    %1187 = vmatpush.bf16.msra.mxu0 %v1179
    %1188 = vmatpush.bf16.msra.mxu0 %v1172
    %1189 = vmatmul.bf16.gmra.mxu0 %v1176
    %v1190 = vpop.f32.mrf.mxu0
    %v1191 = vadd.f32 0.0, %v1190
    %v1192 = vpop.f32.mrf.mxu0
    %1193 = vdwg.mxu0
    %v1194 = vadd.f32 %v1160, %v1191
    %v1195 = vld [vmem:[%s16 + $0x18] sm:$0xf]
    %v1196 = vld [vmem:[%s16 + $0x1c] sm:$0xf]
    %v1197 = vld [vmem:[%s16 + $0x20] sm:$0xf]
    %v1198 = vrot.slane %v1128, 2
    %v1202 = vunpack.c.l.b16 %v1195
    %v1203 = vunpack.c.l.b16 %v1196
    %v1204 = vunpack.c.l.b16 %v1197
    %v1205 = vpack.c.b16 %v1203, %v1202
    %v1206 = vpack.c.b16 %v1204, %v1204
    %v1209 = vsel %vm604, %v1198, 0
    %v1212 = vsel %vm620, %v1206, 0
    %1214 = vmatpush.bf16.msra.mxu0 0
    %1215 = vmatpush.bf16.msra.mxu0 0
    %1216 = vmatpush.bf16.msra.mxu0 0
    %1217 = vmatpush.bf16.msra.mxu0 0
    %1218 = vmatpush.bf16.msra.mxu0 0
    %1219 = vmatpush.bf16.msra.mxu0 0
    %1220 = vmatpush.bf16.msra.mxu0 %v1212
    %1221 = vmatpush.bf16.msra.mxu0 %v1205
    %1222 = vmatmul.bf16.gmra.mxu0 %v1209
    %v1223 = vpop.f32.mrf.mxu0
    %v1224 = vadd.f32 0.0, %v1223
    %v1225 = vpop.f32.mrf.mxu0
    %1226 = vdwg.mxu0
    %v1227 = vadd.f32 %v1194, %v1224
    %v1228 = vmax.f32 %v1227, 0.0
    %v1229 = vld [vmem:[%s18] sm:$0xf]
    %v1230 = vld [vmem:[%s18 + $0x4] sm:$0xf]
    %v1231 = vld [vmem:[%s18 + $0x8] sm:$0xf]
    %v1232 = vld [vmem:[%s18 + $0xc] sm:$0xf]
    %v1233 = vld [vmem:[%s18 + $0x10] sm:$0xf]
    %v1234 = vld [vmem:[%s18 + $0x14] sm:$0xf]
    %v1235 = vld [vmem:[%s18 + $0x18] sm:$0xf]
    %v1236 = vld [vmem:[%s18 + $0x1c] sm:$0xf]
    %v1237 = vld [vmem:[%s18 + $0x20] sm:$0xf]
    %v1238 = vld [vmem:[%s18 + $0x24] sm:$0xf]
    %v1239 = vld [vmem:[%s18 + $0x28] sm:$0xf]
    %v1240 = vld [vmem:[%s18 + $0x2c] sm:$0xf]
    %v1241 = vld [vmem:[%s18 + $0x30] sm:$0xf]
    %v1242 = vld [vmem:[%s18 + $0x34] sm:$0xf]
    %v1243 = vld [vmem:[%s18 + $0x38] sm:$0xf]
    %v1244 = vld [vmem:[%s18 + $0x3c] sm:$0xf]
    %v1245 = vpack.c.bf16 %v1228, %v1228
    %v1246 = vld [vmem:[%s19] sm:$0x1]
    %v1248 = vperm.slane %v1246, 0
    %v1266 = vunpack.c.l.b16 %v1229
    %v1267 = vunpack.c.l.b16 %v1230
    %v1268 = vunpack.c.l.b16 %v1231
    %v1269 = vunpack.c.l.b16 %v1232
    %v1270 = vunpack.c.l.b16 %v1233
    %v1271 = vunpack.c.l.b16 %v1234
    %v1272 = vunpack.c.l.b16 %v1235
    %v1273 = vunpack.c.l.b16 %v1236
    %v1274 = vunpack.c.l.b16 %v1237
    %v1275 = vunpack.c.l.b16 %v1238
    %v1276 = vunpack.c.l.b16 %v1239
    %v1277 = vunpack.c.l.b16 %v1240
    %v1278 = vunpack.c.l.b16 %v1241
    %v1279 = vunpack.c.l.b16 %v1242
    %v1280 = vunpack.c.l.b16 %v1243
    %v1281 = vunpack.c.l.b16 %v1244
    %v1282 = vpack.c.b16 %v1267, %v1266
    %v1283 = vpack.c.b16 %v1269, %v1268
    %v1284 = vpack.c.b16 %v1271, %v1270
    %v1285 = vpack.c.b16 %v1273, %v1272
    %v1286 = vpack.c.b16 %v1275, %v1274
    %v1287 = vpack.c.b16 %v1277, %v1276
    %v1288 = vpack.c.b16 %v1279, %v1278
    %v1289 = vpack.c.b16 %v1281, %v1280
    %1298 = vmatpush.bf16.msra.mxu0 %v1289
    %1299 = vmatpush.bf16.msra.mxu0 %v1288
    %1300 = vmatpush.bf16.msra.mxu0 %v1287
    %1301 = vmatpush.bf16.msra.mxu0 %v1286
    %1302 = vmatpush.bf16.msra.mxu0 %v1285
    %1303 = vmatpush.bf16.msra.mxu0 %v1284
    %1304 = vmatpush.bf16.msra.mxu0 %v1283
    %1305 = vmatpush.bf16.msra.mxu0 %v1282
    %1306 = vmatmul.bf16.gmra.mxu0 %v1245
    %v1307 = vpop.f32.mrf.mxu0
    %v1308 = vadd.f32 %v1248, %v1307
    %v1309 = vpop.f32.mrf.mxu0
    %1310 = vdwg.mxu0
    %v1311 = vmax.f32 %v1308, 0.0
    %v1312 = vld [vmem:[%s20] sm:$0xf]
    %v1313 = vld [vmem:[%s20 + $0x4] sm:$0xf]
    %v1314 = vld [vmem:[%s20 + $0x8] sm:$0xf]
    %v1315 = vld [vmem:[%s20 + $0xc] sm:$0xf]
    %v1316 = vld [vmem:[%s20 + $0x10] sm:$0xf]
    %v1317 = vld [vmem:[%s20 + $0x14] sm:$0xf]
    %v1318 = vld [vmem:[%s20 + $0x18] sm:$0xf]
    %v1319 = vld [vmem:[%s20 + $0x1c] sm:$0xf]
    %v1320 = vpack.c.bf16 %v1311, %v1311
    %v1321 = vld [vmem:[%s21] sm:$0x1]
    %v1323 = vperm.slane %v1321, 0
    %v1333 = vunpack.c.l.b16 %v1312
    %v1334 = vunpack.c.l.b16 %v1313
    %v1335 = vunpack.c.l.b16 %v1314
    %v1336 = vunpack.c.l.b16 %v1315
    %v1337 = vunpack.c.l.b16 %v1316
    %v1338 = vunpack.c.l.b16 %v1317
    %v1339 = vunpack.c.l.b16 %v1318
    %v1340 = vunpack.c.l.b16 %v1319
    %v1341 = vpack.c.b16 %v1334, %v1333
    %v1342 = vpack.c.b16 %v1336, %v1335
    %v1343 = vpack.c.b16 %v1338, %v1337
    %v1344 = vpack.c.b16 %v1340, %v1339
    %v1350 = vsel %vm439, %v1320, 0
    %1352 = vmatpush.bf16.msra.mxu0 0
    %1353 = vmatpush.bf16.msra.mxu0 0
    %1354 = vmatpush.bf16.msra.mxu0 0
    %1355 = vmatpush.bf16.msra.mxu0 0
    %1356 = vmatpush.bf16.msra.mxu0 %v1344
    %1357 = vmatpush.bf16.msra.mxu0 %v1343
    %1358 = vmatpush.bf16.msra.mxu0 %v1342
    %1359 = vmatpush.bf16.msra.mxu0 %v1341
    %1360 = vmatmul.bf16.gmra.mxu0 %v1350
    %v1361 = vpop.f32.mrf.mxu0
    %v1362 = vadd.f32 %v1323, %v1361
    %v1363 = vpop.f32.mrf.mxu0
    %1364 = vdwg.mxu0
    %vm1365 = vcmask 74752
    %v1366 = vsel %vm1365, %v1362, -inf
    %1367 = vmax.xlane.f32.xlu0 %v1366
    %v1368 = vpop.xlane.xlu0 %1367
    %v1369 = vsub.f32 %v1362, %v1368
    %v1370 = vmul.f32 %v1369, 1.442695
    %v1371 = vpow.pop %v1370
    %v1372 = vsel %vm1365, %v1371, 0.0
    %1373 = vadd.xlane.f32.xlu0 %v1372
    %v1374 = vpop.xlane.xlu0 %1373
    %v1375 = vrcp.pop %v1374
    %v1376 = vmul.f32 %v1374, %v1375
    %v1377 = vsub.f32 1.0, %v1376
    %v1378 = vmul.f32 %v1375, %v1377
    %v1379 = vadd.f32 %v1375, %v1378
    %vm1380 = vweird.f32 %v1374
    %vm1381 = vweird.f32 %v1375
    %vm1382 = vmor %vm1380, %vm1381
    %v1383 = vsel %vm1382, %v1375, %v1379
    %v1384 = vand.u32 2147483647, %v1374
    %vm1385 = vcmp.eq.f32.partialorder %v1384, 8.507059e+37
    %v1386 = vand.u32 %v1374, 2147483648
    %v1387 = vor.u32 1.1754944e-38, %v1386
    %v1388 = vsel %vm1385, %v1387, %v1383
    %v1389 = vmul.f32 %v1371, %v1388
    %1390 = vst.msk [vmem:[#allocation2] sm:$0x3] %vm1365, %v1389
    // Predicated region
    $region90: #{attention_model_forward.1} parent=1 // pred_check
      _
    $region91: #{attention_model_forward.1} parent=1 // pred_check_branch
      %1392 = sbr.rel (0) target = $region93
    $region92: #{attention_model_forward.1} parent=1 // pred_region
      %1394 = vsyncadd [#allocation3], 0
      %s1396 = sshll.u32 [#allocation2], 4
      %s1397 = int_to_ptr.vmem [resolvable:$true] %s1396
      %s1398 = sshll.u32 %s22, 4
      %s1399 = int_to_ptr.hbm [resolvable:$true] %s1398
      %1401 = dma.vmem_to_hbm [thread:$0]  %s1397, 32, %s1399, [#allocation3]
    $region93: #{attention_model_forward.1} parent=1 // pred_fallthru
      _
    // Predicated region
    $region94: #{attention_model_forward.1} parent=1 // pred_check
      _
    $region95: #{attention_model_forward.1} parent=1 // pred_check_branch
      %1403 = sbr.rel (0) target = $region97
    $region96: #{attention_model_forward.1} parent=1 // pred_region
      %1405 = dma.done [#allocation3], 32
    $region97: #{attention_model_forward.1} parent=1 // pred_fallthru
      _
    %1406 = vsyncpa [#allocation3], 1

</llo_original>
